<compile_context>
chip_gen: v7x
topology: tpu7x:2x2x1
jax: 0.10.0
libtpu: 0.0.40
codegen_flags: <defaults>
</compile_context>

<pallas_src>
import functools

import jax
import jax.numpy as jnp
from jax.experimental import pallas as pl
from jax.experimental.pallas import tpu as pltpu


# ----------------------------------------------------------------------------
# helpers
# ----------------------------------------------------------------------------
def _round_up(x, m):
    return (x + m - 1) // m * m


def _k_tiling(k):
    """Padded K extent (multiple of 128; multiple of 512 if K-tiling needed)."""
    kpad = _round_up(k, 128)
    if kpad <= 2048:
        return kpad
    return _round_up(k, 512)


@functools.lru_cache(maxsize=1)
def _vmem_capacity_bytes():
    """Physical VMEM per core; conservative 64 MiB (v7x) if query fails."""
    cap = 64 * 1024 * 1024
    try:
        info = pltpu.get_tpu_info()
        cap = int(getattr(info, "vmem_capacity_bytes", cap))
    except Exception:
        pass
    return cap


def _budget():
    """(vmem_limit_bytes, max M tile) tuned per TPU generation."""
    cap = _vmem_capacity_bytes()
    vmem_limit = min(96 * 1024 * 1024, (cap * 3) // 4)
    tm_cap = 512 if cap >= 100 * 1024 * 1024 else 256
    return vmem_limit, tm_cap


def _pick_m_tile(M, tm_cap):
    """M tile (mult of 16) and padded M; >=2 M blocks when M is large enough."""
    if M >= 32:
        tm = min(tm_cap, _round_up((M + 1) // 2, 16))
    else:
        tm = _round_up(max(M, 1), 16)
    return tm, _round_up(M, tm)


# ----------------------------------------------------------------------------
# Pallas kernels: out = relu?(x @ w + b)   (bf16 operands, f32 accumulation)
# ----------------------------------------------------------------------------
def _matmul_bias_kernel_single_k(x_ref, w_ref, b_ref, o_ref, *, apply_relu):
    # Whole K in one block: no accumulator scratch, no init/finalize phases.
    out = jnp.dot(x_ref[...], w_ref[...], preferred_element_type=jnp.float32)
    out = out + b_ref[...]                       # (1, tn) broadcasts
    if apply_relu:
        out = jnp.maximum(out, 0.0)
    o_ref[...] = out.astype(o_ref.dtype)


def _matmul_bias_kernel_acc(x_ref, w_ref, b_ref, o_ref, acc_ref, *, apply_relu):
    @pl.when(pl.program_id(2) == 0)
    def _init():
        acc_ref[...] = jnp.zeros_like(acc_ref)

    acc_ref[...] += jnp.dot(
        x_ref[...], w_ref[...], preferred_element_type=jnp.float32
    )

    @pl.when(pl.program_id(2) == pl.num_programs(2) - 1)
    def _finalize():
        out = acc_ref[...] + b_ref[...]
        if apply_relu:
            out = jnp.maximum(out, 0.0)
        o_ref[...] = out.astype(o_ref.dtype)


def linear_pallas(x, w_pad, b_pad, *, relu, out_dtype):
    """x: (M, K).  w_pad: (Kpad, Npad) bf16, b_pad: (1, Npad) f32.

    Returns the full padded (Mpad, Npad) array in `out_dtype`.  Padded
    rows/cols of w and b are zero, so padded output columns are exactly zero.
    """
    M, K = x.shape
    Kpad, Npad = w_pad.shape
    assert K <= Kpad and Npad % 128 == 0 and Kpad % 128 == 0

    vmem_limit, tm_cap = _budget()
    tm, Mpad = _pick_m_tile(M, tm_cap)
    tn = 128

    xb = x.astype(jnp.bfloat16)
    if Mpad != M or Kpad != K:
        xb = jnp.pad(xb, ((0, Mpad - M), (0, Kpad - K)))

    if Kpad <= 2048:
        # Single K step: specialized kernel, 2-D fully-parallel grid.
        return pl.pallas_call(
            functools.partial(_matmul_bias_kernel_single_k, apply_relu=relu),
            out_shape=jax.ShapeDtypeStruct((Mpad, Npad), out_dtype),
            grid_spec=pltpu.PrefetchScalarGridSpec(
                num_scalar_prefetch=0,
                grid=(Mpad // tm, Npad // tn),
                in_specs=[
                    pl.BlockSpec((tm, Kpad), lambda i, j: (i, 0)),
                    pl.BlockSpec((Kpad, tn), lambda i, j: (0, j)),
                    pl.BlockSpec((1, tn), lambda i, j: (0, j)),
                ],
                out_specs=pl.BlockSpec((tm, tn), lambda i, j: (i, j)),
            ),
            compiler_params=pltpu.CompilerParams(
                dimension_semantics=("parallel", "parallel"),
                vmem_limit_bytes=vmem_limit,
            ),
        )(xb, w_pad, b_pad)

    # General K-tiled path (unused for this net's shapes; kept for robustness).
    tk = 512
    assert Kpad % tk == 0
    return pl.pallas_call(
        functools.partial(_matmul_bias_kernel_acc, apply_relu=relu),
        out_shape=jax.ShapeDtypeStruct((Mpad, Npad), out_dtype),
        grid_spec=pltpu.PrefetchScalarGridSpec(
            num_scalar_prefetch=0,
            grid=(Mpad // tm, Npad // tn, Kpad // tk),
            in_specs=[
                pl.BlockSpec((tm, tk), lambda i, j, k: (i, k)),
                pl.BlockSpec((tk, tn), lambda i, j, k: (k, j)),
                pl.BlockSpec((1, tn), lambda i, j, k: (0, j)),
            ],
            out_specs=pl.BlockSpec((tm, tn), lambda i, j, k: (i, j)),
            scratch_shapes=[pltpu.VMEM((tm, tn), jnp.float32)],
        ),
        compiler_params=pltpu.CompilerParams(
            dimension_semantics=("parallel", "parallel", "arbitrary"),
            vmem_limit_bytes=vmem_limit,
        ),
    )(xb, w_pad, b_pad)


# ----------------------------------------------------------------------------
# Pallas kernel: fused FC head  out = (relu(x @ w1 + b1)) @ w2 + b2
# ----------------------------------------------------------------------------
def _fc_head_kernel(x_ref, w1_ref, b1_ref, w2_ref, b2_ref, o_ref):
    h = jnp.dot(x_ref[...], w1_ref[...], preferred_element_type=jnp.float32)
    h = jnp.maximum(h + b1_ref[...], 0.0)
    out = jnp.dot(
        h.astype(jnp.bfloat16), w2_ref[...], preferred_element_type=jnp.float32
    )
    o_ref[...] = (out + b2_ref[...]).astype(o_ref.dtype)


def fc_head_pallas(x, w1_pad, b1_pad, w2_pad, b2_pad, n_actions):
    """x: (B, K) bf16.  w1_pad: (Kw, 512) bf16, w2_pad: (512, Npad) bf16."""
    M, K = x.shape
    Kw, Hd = w1_pad.shape
    _, Npad = w2_pad.shape
    assert K <= Kw and Hd % 128 == 0 and Npad % 128 == 0

    vmem_limit, tm_cap = _budget()
    tm, Mpad = _pick_m_tile(M, tm_cap)

    xb = x.astype(jnp.bfloat16)
    if Mpad != M or Kw != K:
        xb = jnp.pad(xb, ((0, Mpad - M), (0, Kw - K)))

    out = pl.pallas_call(
        _fc_head_kernel,
        out_shape=jax.ShapeDtypeStruct((Mpad, Npad), jnp.float32),
        grid_spec=pltpu.PrefetchScalarGridSpec(
            num_scalar_prefetch=0,
            grid=(Mpad // tm,),
            in_specs=[
                pl.BlockSpec((tm, Kw), lambda i: (i, 0)),
                pl.BlockSpec((Kw, Hd), lambda i: (0, 0)),
                pl.BlockSpec((1, Hd), lambda i: (0, 0)),
                pl.BlockSpec((Hd, Npad), lambda i: (0, 0)),
                pl.BlockSpec((1, Npad), lambda i: (0, 0)),
            ],
            out_specs=pl.BlockSpec((tm, Npad), lambda i: (i, 0)),
        ),
        compiler_params=pltpu.CompilerParams(
            dimension_semantics=("parallel",),
            vmem_limit_bytes=vmem_limit,
        ),
    )(xb, w1_pad, b1_pad, w2_pad, b2_pad)
    return out[:M, :n_actions]


# ----------------------------------------------------------------------------
# Conv2d (valid padding, square stride) = im2col glue + tiled Pallas matmul
# ----------------------------------------------------------------------------
def conv2d_pallas(x_nhwc, w_pad, b_pad, *, cin, kh, kw, stride, relu):
    """x_nhwc: (B, H, W, Cfull) bf16; only the first `cin` channels are real.

    Returns (B, oh, ow, Npad) bf16 with zero padded channels (lane-dense).
    """
    B, H, W, _ = x_nhwc.shape
    oh = (H - kh) // stride + 1
    ow = (W - kw) // stride + 1

    # im2col: (kh*kw) strided shifted views (channel slice folds the previous
    # layer's channel padding away) -> (B*oh*ow, kh*kw*cin) bf16.
    patches = []
    for i in range(kh):
        for j in range(kw):
            patches.append(
                x_nhwc[:, i:i + stride * oh:stride, j:j + stride * ow:stride, :cin]
            )
    p = jnp.stack(patches, axis=3).reshape(B * oh * ow, kh * kw * cin)

    out = linear_pallas(p, w_pad, b_pad, relu=relu, out_dtype=jnp.bfloat16)
    Npad = w_pad.shape[1]
    return out[: B * oh * ow].reshape(B, oh, ow, Npad)


# ----------------------------------------------------------------------------
# Full DQNSolver forward (consumes params prepared by prepare_params)
# ----------------------------------------------------------------------------
def dqn_forward(x, p, *, n_actions):
    # x: (B, C, H, W, 1)  -- PyTorch forward does x.squeeze(-1)
    x = jnp.squeeze(x, axis=-1)               # (B, C, H, W)  NCHW
    x = jnp.transpose(x, (0, 2, 3, 1))        # -> NHWC for the conv path
    x = x.astype(jnp.bfloat16)                # single activation cast

    x = conv2d_pallas(x, p["w1m"], p["b1p"], cin=x.shape[-1],
                      kh=8, kw=8, stride=4, relu=True)
    x = conv2d_pallas(x, p["w2m"], p["b2p"], cin=32,
                      kh=4, kw=4, stride=2, relu=True)
    x = conv2d_pallas(x, p["w3m"], p["b3p"], cin=64,
                      kh=3, kw=3, stride=1, relu=True)

    # Flatten the channel-padded NHWC conv3 output directly; fc1's weight was
    # built for this (NHWC order + zero rows for the padded channels), so no
    # activation slice/transpose is needed here.
    B = x.shape[0]
    flat = x.reshape(B, -1)

    return fc_head_pallas(
        flat, p["fc1_wm"], p["fc1_bp"], p["fc2_wm"], p["fc2_bp"], n_actions
    )


# ----------------------------------------------------------------------------
# One-time parameter preparation (layout folding, padding, bf16 cast)
# ----------------------------------------------------------------------------
def prepare_params(params, input_chw, n_actions):
    C, H, W = input_chw

    def co(s, k, st):
        return (s - k) // st + 1

    h1, w1 = co(H, 8, 4), co(W, 8, 4)
    h2, w2 = co(h1, 4, 2), co(w1, 4, 2)
    h3, w3 = co(h2, 3, 1), co(w2, 3, 1)

    def conv_w(w_oihw):
        Cout, Cin, kh, kw = w_oihw.shape
        K = kh * kw * Cin
        Kpad = _k_tiling(K)
        Npad = _round_up(Cout, 128)
        wm = jnp.transpose(w_oihw, (2, 3, 1, 0)).reshape(K, Cout)
        return jnp.pad(wm, ((0, Kpad - K), (0, Npad - Cout))).astype(jnp.bfloat16)

    def conv_b(b):
        Cout = b.shape[0]
        Npad = _round_up(Cout, 128)
        return jnp.pad(b, (0, Npad - Cout)).reshape(1, Npad).astype(jnp.float32)

    # fc1: fold both the PyTorch NCHW .view(B,-1) flatten order AND the conv3
    # channel padding (64 -> 128, zero rows) into the weight, so the padded
    # bf16 conv3 activation can be consumed with no slice/transpose.
    c3 = 64
    c3_pad = _round_up(c3, 128)
    fc1_w = params["fc1_w"].reshape(512, c3, h3, w3)
    fc1_w = jnp.transpose(fc1_w, (0, 2, 3, 1))                     # (512,h3,w3,64)
    fc1_w = jnp.pad(fc1_w, ((0, 0), (0, 0), (0, 0), (0, c3_pad - c3)))
    fc1_wm = fc1_w.reshape(512, h3 * w3 * c3_pad).T.astype(jnp.bfloat16)
    fc1_bp = params["fc1_b"].reshape(1, 512).astype(jnp.float32)

    Na_pad = _round_up(n_actions, 128)
    fc2_wm = jnp.pad(
        params["fc2_w"].T, ((0, 0), (0, Na_pad - n_actions))
    ).astype(jnp.bfloat16)
    fc2_bp = jnp.pad(
        params["fc2_b"], (0, Na_pad - n_actions)
    ).reshape(1, Na_pad).astype(jnp.float32)

    return {
        "w1m": conv_w(params["w1"]), "b1p": conv_b(params["b1"]),
        "w2m": conv_w(params["w2"]), "b2p": conv_b(params["b2"]),
        "w3m": conv_w(params["w3"]), "b3p": conv_b(params["b3"]),
        "fc1_wm": fc1_wm, "fc1_bp": fc1_bp,
        "fc2_wm": fc2_wm, "fc2_bp": fc2_bp,
    }


# ----------------------------------------------------------------------------
# Pure-JAX f32 reference (for tolerance checking, not used in the fast path)
# ----------------------------------------------------------------------------
def dqn_reference(x, params):
    x = jnp.squeeze(x, axis=-1)

    def conv(z, w, b, stride):
        y = jax.lax.conv_general_dilated(
            z, w, (stride, stride), "VALID",
            dimension_numbers=("NCHW", "OIHW", "NCHW"))
        return jax.nn.relu(y + b[None, :, None, None])

    x = conv(x, params["w1"], params["b1"], 4)
    x = conv(x, params["w2"], params["b2"], 2)
    x = conv(x, params["w3"], params["b3"], 1)
    B = x.shape[0]
    x = x.reshape(B, -1)
    x = jax.nn.relu(x @ params["fc1_w"].T + params["fc1_b"])
    return x @ params["fc2_w"].T + params["fc2_b"]


# ----------------------------------------------------------------------------
# Deterministic parameter init (PyTorch-shaped tensors, uniform +-1/sqrt(fan_in))
# ----------------------------------------------------------------------------
def init_params(key, in_channels, n_actions, hw):
    H, W = hw

    def co(s, k, st):
        return (s - k) // st + 1

    h = co(co(co(H, 8, 4), 4, 2), 3, 1)
    w = co(co(co(W, 8, 4), 4, 2), 3, 1)
    conv_out_size = 64 * h * w

    keys = jax.random.split(key, 10)

    def u(k, shape, fan_in):
        bound = 1.0 / jnp.sqrt(jnp.float32(fan_in))
        return jax.random.uniform(k, shape, jnp.float32, -bound, bound)

    return {
        "w1": u(keys[0], (32, in_channels, 8, 8), in_channels * 8 * 8),
        "b1": u(keys[1], (32,), in_channels * 8 * 8),
        "w2": u(keys[2], (64, 32, 4, 4), 32 * 4 * 4),
        "b2": u(keys[3], (64,), 32 * 4 * 4),
        "w3": u(keys[4], (64, 64, 3, 3), 64 * 3 * 3),
        "b3": u(keys[5], (64,), 64 * 3 * 3),
        "fc1_w": u(keys[6], (512, conv_out_size), conv_out_size),
        "fc1_b": u(keys[7], (512,), conv_out_size),
        "fc2_w": u(keys[8], (n_actions, 512), 512),
        "fc2_b": u(keys[9], (n_actions,), 512),
    }


if __name__ == "__main__":
    # Smallest spatial size that survives the conv stack: 36 -> 8 -> 3 -> 1
    B, C, H, W = 2, 4, 36, 36
    n_actions = 6

    key = jax.random.PRNGKey(0)
    kx, kp = jax.random.split(key)
    x = jax.random.normal(kx, (B, C, H, W, 1), jnp.float32)

    params = init_params(kp, C, n_actions, (H, W))
    prepared = prepare_params(params, (C, H, W), n_actions)   # one-time layout work

    fwd = jax.jit(functools.partial(dqn_forward, n_actions=n_actions))
    out = jax.block_until_ready(fwd(x, prepared))

    assert out.shape == (B, n_actions), out.shape
    assert out.dtype == jnp.float32

    # Loose tolerance vs f32 reference (bf16 MXU operands, f32 accumulation).
    ref = dqn_reference(x, params)
    err = float(jnp.max(jnp.abs(out - ref)))
    assert err < 2e-1, f"mismatch vs f32 reference: max abs err = {err}"

    print("KERNEL_OK")
</pallas_src>

<mosaic_0001>
module attributes {stable_mosaic.version = 11 : i64} {
  func.func @_matmul_bias_kernel_single_k(%arg0: i32, %arg1: i32, %arg2: memref<64x256xbf16, #tpu.memory_space<vmem>>, %arg3: memref<256x128xbf16, #tpu.memory_space<vmem>>, %arg4: memref<1x128xf32, #tpu.memory_space<vmem>>, %arg5: memref<64x128xbf16, #tpu.memory_space<vmem>>) attributes {dimension_semantics = [#tpu.dimension_semantics<parallel>, #tpu.dimension_semantics<parallel>], iteration_bounds = array<i64: 2, 1>, scalar_prefetch = 0 : i64, scratch_operands = 0 : i64, tpu.core_type = #tpu.core_type<tc>, window_params = [{transform_indices = @transform_0, window_bounds = array<i64: 64, 256>}, {transform_indices = @transform_1, window_bounds = array<i64: 256, 128>}, {transform_indices = @transform_2, window_bounds = array<i64: 1, 128>}, {transform_indices = @transform_3, window_bounds = array<i64: 64, 128>}]} {
    %c0 = arith.constant 0 : index
    %c0_0 = arith.constant 0 : index
    %0 = vector.load %arg2[%c0, %c0_0] : memref<64x256xbf16, #tpu.memory_space<vmem>>, vector<64x256xbf16>
    %c0_1 = arith.constant 0 : index
    %c0_2 = arith.constant 0 : index
    %1 = vector.load %arg3[%c0_1, %c0_2] : memref<256x128xbf16, #tpu.memory_space<vmem>>, vector<256x128xbf16>
    %cst = arith.constant dense<0.000000e+00> : vector<64x128xf32>
    %2 = tpu.matmul %0, %1, %cst {dimension_numbers = #tpu.dot_dimension_numbers<[1], [0], [0], [1], [0, 0, 1, 1], [], []>} : vector<64x256xbf16>, vector<256x128xbf16>, vector<64x128xf32> -> vector<64x128xf32>
    %c0_3 = arith.constant 0 : index
    %c0_4 = arith.constant 0 : index
    %3 = vector.load %arg4[%c0_3, %c0_4] : memref<1x128xf32, #tpu.memory_space<vmem>>, vector<1x128xf32>
    %4 = vector.broadcast %3 : vector<1x128xf32> to vector<64x128xf32>
    %5 = arith.addf %2, %4 : vector<64x128xf32>
    %cst_5 = arith.constant 0.000000e+00 : f32
    %6 = vector.broadcast %cst_5 : f32 to vector<64x128xf32>
    %7 = arith.maximumf %5, %6 : vector<64x128xf32>
    %8 = arith.truncf %7 : vector<64x128xf32> to vector<64x128xbf16>
    %c0_6 = arith.constant 0 : index
    %c0_7 = arith.constant 0 : index
    %9 = vector.load %arg5[%c0_6, %c0_7] : memref<64x128xbf16, #tpu.memory_space<vmem>>, vector<64x128xbf16>
    tpu.vector_store %arg5[%c0_6, %c0_7], %8 {strides = array<i32>} : memref<64x128xbf16, #tpu.memory_space<vmem>>, vector<64x128xbf16>,
    return
  }
  func.func @transform_0(%arg0: i32, %arg1: i32) -> (i32, i32) {
    %c0_i32 = arith.constant 0 : i32
    %c0_i32_0 = arith.constant 0 : i32
    return %arg0, %c0_i32 : i32, i32
  }
  func.func @transform_1(%arg0: i32, %arg1: i32) -> (i32, i32) {
    %c0_i32 = arith.constant 0 : i32
    %c0_i32_0 = arith.constant 0 : i32
    return %c0_i32, %arg1 : i32, i32
  }
  func.func @transform_2(%arg0: i32, %arg1: i32) -> (i32, i32) {
    %c0_i32 = arith.constant 0 : i32
    %c0_i32_0 = arith.constant 0 : i32
    return %c0_i32, %arg1 : i32, i32
  }
  func.func @transform_3(%arg0: i32, %arg1: i32) -> (i32, i32) {
    %c0_i32 = arith.constant 0 : i32
    return %arg0, %arg1 : i32, i32
  }
}

module attributes {stable_mosaic.version = 11 : i64} {
  func.func @_matmul_bias_kernel_single_k(%arg0: i32, %arg1: i32, %arg2: memref<32x512xbf16, #tpu.memory_space<vmem>>, %arg3: memref<512x128xbf16, #tpu.memory_space<vmem>>, %arg4: memref<1x128xf32, #tpu.memory_space<vmem>>, %arg5: memref<32x128xbf16, #tpu.memory_space<vmem>>) attributes {dimension_semantics = [#tpu.dimension_semantics<parallel>, #tpu.dimension_semantics<parallel>], iteration_bounds = array<i64: 1, 1>, scalar_prefetch = 0 : i64, scratch_operands = 0 : i64, tpu.core_type = #tpu.core_type<tc>, window_params = [{transform_indices = @transform_0, window_bounds = array<i64: 32, 512>}, {transform_indices = @transform_1, window_bounds = array<i64: 512, 128>}, {transform_indices = @transform_2, window_bounds = array<i64: 1, 128>}, {transform_indices = @transform_3, window_bounds = array<i64: 32, 128>}]} {
    %c0 = arith.constant 0 : index
    %c0_0 = arith.constant 0 : index
    %0 = vector.load %arg2[%c0, %c0_0] : memref<32x512xbf16, #tpu.memory_space<vmem>>, vector<32x512xbf16>
    %c0_1 = arith.constant 0 : index
    %c0_2 = arith.constant 0 : index
    %1 = vector.load %arg3[%c0_1, %c0_2] : memref<512x128xbf16, #tpu.memory_space<vmem>>, vector<512x128xbf16>
    %cst = arith.constant dense<0.000000e+00> : vector<32x128xf32>
    %2 = tpu.matmul %0, %1, %cst {dimension_numbers = #tpu.dot_dimension_numbers<[1], [0], [0], [1], [0, 0, 1, 1], [], []>} : vector<32x512xbf16>, vector<512x128xbf16>, vector<32x128xf32> -> vector<32x128xf32>
    %c0_3 = arith.constant 0 : index
    %c0_4 = arith.constant 0 : index
    %3 = vector.load %arg4[%c0_3, %c0_4] : memref<1x128xf32, #tpu.memory_space<vmem>>, vector<1x128xf32>
    %4 = vector.broadcast %3 : vector<1x128xf32> to vector<32x128xf32>
    %5 = arith.addf %2, %4 : vector<32x128xf32>
    %cst_5 = arith.constant 0.000000e+00 : f32
    %6 = vector.broadcast %cst_5 : f32 to vector<32x128xf32>
    %7 = arith.maximumf %5, %6 : vector<32x128xf32>
    %8 = arith.truncf %7 : vector<32x128xf32> to vector<32x128xbf16>
    %c0_6 = arith.constant 0 : index
    %c0_7 = arith.constant 0 : index
    %9 = vector.load %arg5[%c0_6, %c0_7] : memref<32x128xbf16, #tpu.memory_space<vmem>>, vector<32x128xbf16>
    tpu.vector_store %arg5[%c0_6, %c0_7], %8 {strides = array<i32>} : memref<32x128xbf16, #tpu.memory_space<vmem>>, vector<32x128xbf16>,
    return
  }
  func.func @transform_0(%arg0: i32, %arg1: i32) -> (i32, i32) {
    %c0_i32 = arith.constant 0 : i32
    %c0_i32_0 = arith.constant 0 : i32
    return %arg0, %c0_i32 : i32, i32
  }
  func.func @transform_1(%arg0: i32, %arg1: i32) -> (i32, i32) {
    %c0_i32 = arith.constant 0 : i32
    %c0_i32_0 = arith.constant 0 : i32
    return %c0_i32, %arg1 : i32, i32
  }
  func.func @transform_2(%arg0: i32, %arg1: i32) -> (i32, i32) {
    %c0_i32 = arith.constant 0 : i32
    %c0_i32_0 = arith.constant 0 : i32
    return %c0_i32, %arg1 : i32, i32
  }
  func.func @transform_3(%arg0: i32, %arg1: i32) -> (i32, i32) {
    %c0_i32 = arith.constant 0 : i32
    return %arg0, %arg1 : i32, i32
  }
}

module attributes {stable_mosaic.version = 11 : i64} {
  func.func @_matmul_bias_kernel_single_k(%arg0: i32, %arg1: i32, %arg2: memref<16x640xbf16, #tpu.memory_space<vmem>>, %arg3: memref<640x128xbf16, #tpu.memory_space<vmem>>, %arg4: memref<1x128xf32, #tpu.memory_space<vmem>>, %arg5: memref<16x128xbf16, #tpu.memory_space<vmem>>) attributes {dimension_semantics = [#tpu.dimension_semantics<parallel>, #tpu.dimension_semantics<parallel>], iteration_bounds = array<i64: 1, 1>, scalar_prefetch = 0 : i64, scratch_operands = 0 : i64, tpu.core_type = #tpu.core_type<tc>, window_params = [{transform_indices = @transform_0, window_bounds = array<i64: 16, 640>}, {transform_indices = @transform_1, window_bounds = array<i64: 640, 128>}, {transform_indices = @transform_2, window_bounds = array<i64: 1, 128>}, {transform_indices = @transform_3, window_bounds = array<i64: 16, 128>}]} {
    %c0 = arith.constant 0 : index
    %c0_0 = arith.constant 0 : index
    %0 = vector.load %arg2[%c0, %c0_0] : memref<16x640xbf16, #tpu.memory_space<vmem>>, vector<16x640xbf16>
    %c0_1 = arith.constant 0 : index
    %c0_2 = arith.constant 0 : index
    %1 = vector.load %arg3[%c0_1, %c0_2] : memref<640x128xbf16, #tpu.memory_space<vmem>>, vector<640x128xbf16>
    %cst = arith.constant dense<0.000000e+00> : vector<16x128xf32>
    %2 = tpu.matmul %0, %1, %cst {dimension_numbers = #tpu.dot_dimension_numbers<[1], [0], [0], [1], [0, 0, 1, 1], [], []>} : vector<16x640xbf16>, vector<640x128xbf16>, vector<16x128xf32> -> vector<16x128xf32>
    %c0_3 = arith.constant 0 : index
    %c0_4 = arith.constant 0 : index
    %3 = vector.load %arg4[%c0_3, %c0_4] : memref<1x128xf32, #tpu.memory_space<vmem>>, vector<1x128xf32>
    %4 = vector.broadcast %3 : vector<1x128xf32> to vector<16x128xf32>
    %5 = arith.addf %2, %4 : vector<16x128xf32>
    %cst_5 = arith.constant 0.000000e+00 : f32
    %6 = vector.broadcast %cst_5 : f32 to vector<16x128xf32>
    %7 = arith.maximumf %5, %6 : vector<16x128xf32>
    %8 = arith.truncf %7 : vector<16x128xf32> to vector<16x128xbf16>
    %c0_6 = arith.constant 0 : index
    %c0_7 = arith.constant 0 : index
    %9 = vector.load %arg5[%c0_6, %c0_7] : memref<16x128xbf16, #tpu.memory_space<vmem>>, vector<16x128xbf16>
    tpu.vector_store %arg5[%c0_6, %c0_7], %8 {strides = array<i32>} : memref<16x128xbf16, #tpu.memory_space<vmem>>, vector<16x128xbf16>,
    return
  }
  func.func @transform_0(%arg0: i32, %arg1: i32) -> (i32, i32) {
    %c0_i32 = arith.constant 0 : i32
    %c0_i32_0 = arith.constant 0 : i32
    return %arg0, %c0_i32 : i32, i32
  }
  func.func @transform_1(%arg0: i32, %arg1: i32) -> (i32, i32) {
    %c0_i32 = arith.constant 0 : i32
    %c0_i32_0 = arith.constant 0 : i32
    return %c0_i32, %arg1 : i32, i32
  }
  func.func @transform_2(%arg0: i32, %arg1: i32) -> (i32, i32) {
    %c0_i32 = arith.constant 0 : i32
    %c0_i32_0 = arith.constant 0 : i32
    return %c0_i32, %arg1 : i32, i32
  }
  func.func @transform_3(%arg0: i32, %arg1: i32) -> (i32, i32) {
    %c0_i32 = arith.constant 0 : i32
    return %arg0, %arg1 : i32, i32
  }
}

module attributes {stable_mosaic.version = 11 : i64} {
  func.func @_fc_head_kernel(%arg0: i32, %arg1: memref<16x128xbf16, #tpu.memory_space<vmem>>, %arg2: memref<128x512xbf16, #tpu.memory_space<vmem>>, %arg3: memref<1x512xf32, #tpu.memory_space<vmem>>, %arg4: memref<512x128xbf16, #tpu.memory_space<vmem>>, %arg5: memref<1x128xf32, #tpu.memory_space<vmem>>, %arg6: memref<16x128xf32, #tpu.memory_space<vmem>>) attributes {dimension_semantics = [#tpu.dimension_semantics<parallel>], iteration_bounds = array<i64: 1>, scalar_prefetch = 0 : i64, scratch_operands = 0 : i64, tpu.core_type = #tpu.core_type<tc>, window_params = [{transform_indices = @transform_0, window_bounds = array<i64: 16, 128>}, {pipeline_mode = #tpu.pipeline_mode<synchronous>, transform_indices = @transform_1, window_bounds = array<i64: 128, 512>}, {pipeline_mode = #tpu.pipeline_mode<synchronous>, transform_indices = @transform_2, window_bounds = array<i64: 1, 512>}, {pipeline_mode = #tpu.pipeline_mode<synchronous>, transform_indices = @transform_3, window_bounds = array<i64: 512, 128>}, {pipeline_mode = #tpu.pipeline_mode<synchronous>, transform_indices = @transform_4, window_bounds = array<i64: 1, 128>}, {transform_indices = @transform_5, window_bounds = array<i64: 16, 128>}]} {
    %c0 = arith.constant 0 : index
    %c0_0 = arith.constant 0 : index
    %0 = vector.load %arg1[%c0, %c0_0] : memref<16x128xbf16, #tpu.memory_space<vmem>>, vector<16x128xbf16>
    %c0_1 = arith.constant 0 : index
    %c0_2 = arith.constant 0 : index
    %1 = vector.load %arg2[%c0_1, %c0_2] : memref<128x512xbf16, #tpu.memory_space<vmem>>, vector<128x512xbf16>
    %cst = arith.constant dense<0.000000e+00> : vector<16x512xf32>
    %2 = tpu.matmul %0, %1, %cst {dimension_numbers = #tpu.dot_dimension_numbers<[1], [0], [0], [1], [0, 0, 1, 1], [], []>} : vector<16x128xbf16>, vector<128x512xbf16>, vector<16x512xf32> -> vector<16x512xf32>
    %c0_3 = arith.constant 0 : index
    %c0_4 = arith.constant 0 : index
    %3 = vector.load %arg3[%c0_3, %c0_4] : memref<1x512xf32, #tpu.memory_space<vmem>>, vector<1x512xf32>
    %4 = vector.broadcast %3 : vector<1x512xf32> to vector<16x512xf32>
    %5 = arith.addf %2, %4 : vector<16x512xf32>
    %cst_5 = arith.constant 0.000000e+00 : f32
    %6 = vector.broadcast %cst_5 : f32 to vector<16x512xf32>
    %7 = arith.maximumf %5, %6 : vector<16x512xf32>
    %8 = arith.truncf %7 : vector<16x512xf32> to vector<16x512xbf16>
    %c0_6 = arith.constant 0 : index
    %c0_7 = arith.constant 0 : index
    %9 = vector.load %arg4[%c0_6, %c0_7] : memref<512x128xbf16, #tpu.memory_space<vmem>>, vector<512x128xbf16>
    %cst_8 = arith.constant dense<0.000000e+00> : vector<16x128xf32>
    %10 = tpu.matmul %8, %9, %cst_8 {dimension_numbers = #tpu.dot_dimension_numbers<[1], [0], [0], [1], [0, 0, 1, 1], [], []>} : vector<16x512xbf16>, vector<512x128xbf16>, vector<16x128xf32> -> vector<16x128xf32>
    %c0_9 = arith.constant 0 : index
    %c0_10 = arith.constant 0 : index
    %11 = vector.load %arg5[%c0_9, %c0_10] : memref<1x128xf32, #tpu.memory_space<vmem>>, vector<1x128xf32>
    %12 = vector.broadcast %11 : vector<1x128xf32> to vector<16x128xf32>
    %13 = arith.addf %10, %12 : vector<16x128xf32>
    %c0_11 = arith.constant 0 : index
    %c0_12 = arith.constant 0 : index
    %14 = vector.load %arg6[%c0_11, %c0_12] : memref<16x128xf32, #tpu.memory_space<vmem>>, vector<16x128xf32>
    tpu.vector_store %arg6[%c0_11, %c0_12], %13 {strides = array<i32>} : memref<16x128xf32, #tpu.memory_space<vmem>>, vector<16x128xf32>,
    return
  }
  func.func @transform_0(%arg0: i32) -> (i32, i32) {
    %c0_i32 = arith.constant 0 : i32
    %c0_i32_0 = arith.constant 0 : i32
    return %arg0, %c0_i32 : i32, i32
  }
  func.func @transform_1(%arg0: i32) -> (i32, i32) {
    %c0_i32 = arith.constant 0 : i32
    %c0_i32_0 = arith.constant 0 : i32
    %c0_i32_1 = arith.constant 0 : i32
    return %c0_i32, %c0_i32_0 : i32, i32
  }
  func.func @transform_2(%arg0: i32) -> (i32, i32) {
    %c0_i32 = arith.constant 0 : i32
    %c0_i32_0 = arith.constant 0 : i32
    %c0_i32_1 = arith.constant 0 : i32
    return %c0_i32, %c0_i32_0 : i32, i32
  }
  func.func @transform_3(%arg0: i32) -> (i32, i32) {
    %c0_i32 = arith.constant 0 : i32
    %c0_i32_0 = arith.constant 0 : i32
    %c0_i32_1 = arith.constant 0 : i32
    return %c0_i32, %c0_i32_0 : i32, i32
  }
  func.func @transform_4(%arg0: i32) -> (i32, i32) {
    %c0_i32 = arith.constant 0 : i32
    %c0_i32_0 = arith.constant 0 : i32
    %c0_i32_1 = arith.constant 0 : i32
    return %c0_i32, %c0_i32_0 : i32, i32
  }
  func.func @transform_5(%arg0: i32) -> (i32, i32) {
    %c0_i32 = arith.constant 0 : i32
    %c0_i32_0 = arith.constant 0 : i32
    return %arg0, %c0_i32 : i32, i32
  }
}

</mosaic_0001>

<llo_original>
// kernel: dqn_forward.4
$region0: #{dqn_forward.4}
  #allocation0 [shape = 'u32[]', space=smem, size = 0x4, offset = 0x4, fixed_abs, tag = 'smem constant byte address 0x4 - core index']
  #allocation1 [shape = 'u32[144,128]{1,0:T(1,128)}', space=vmem, size = 0x12000, scoped, tag = 'internal scratch']
  %s0 = inlined_call_operand.vmem [shape: bf16[128,256], index: 0, kind: input, shape index: {}]
  %s1 = inlined_call_operand.vmem [shape: bf16[256,128], index: 1, kind: input, shape index: {}]
  %s2 = inlined_call_operand.vmem [shape: f32[1,128], index: 2, kind: input, shape index: {}]
  %s3 = inlined_call_operand.vmem [shape: bf16[128,128], index: 3, kind: output, shape index: {}]
  %s4 = sld [smem:[#allocation0]]
  $region45: #{dqn_forward.4} parent=0
    _
  %s6 = ssub.s32 1, %s4
  %s7 = scalar_select 0, %s6, %s4
  loop: start=0, step=1, limit=4
  $region2: #{dqn_forward.4} parent=0 // loop_pre_header
    _
  $region3: #{dqn_forward.4} parent=0 // loop_header
    %s9 = sphi 0, %s13
    %p10 = scmp.ge.s32.totalorder %s9, 4
    %s16 = sphi 0, %s28
    %s17 = sphi 0, %s24
    %s18 = sphi 0, %s16
    %s19 = sphi 0, %s17
    %s20 = sphi 0, %s18
    %s21 = sphi 0, %s19
    %s31 = sphi 0, %s33
    %s34 = sphi 0, %s31
    %s35 = sphi 0, %s34
    %s51 = sphi 0, %s35
    %s57 = sphi 0, %s59
    %s60 = sphi 0, %s57
    %s61 = sphi 0, %s60
    %s77 = sphi 0, %s61
    %s83 = sphi 0, %s85
    %s86 = sphi 0, %s83
    %s87 = sphi 0, %s86
    %s103 = sphi 0, %s87
    %s111 = sphi 0, %s113
    %s114 = sphi 0, %s111
    %s115 = sphi 0, %s114
    %s131 = sphi 0, %s115
  $region4: #{dqn_forward.4} parent=0 // loop_header_branch
    %12 = sbr.rel (%p10) target = $region8
  $region5: #{dqn_forward.4} parent=0 // loop_body
    %s14 = ssub.s32 %s9, 1
    %s15 = ssub.s32 %s9, 2
    %s22 = sadd.s32 1, %s17
    %p23 = scmp.ge.s32.totalorder %s22, 1
    %s24 = scalar_select %p23, 0, %s22
    %s25 = sadd.s32 1, %s16
    %s26 = scalar_select %p23, %s25, %s16
    %p27 = scmp.ge.s32.totalorder %s26, 2
    %s28 = scalar_select %p27, 0, %s26
    %s29 = ssub.s32 %s16, %s28
    %p30 = scmp.eq.s32.totalorder %s29, 0
    %s32 = sadd.s32 %s31, 1
    %s33 = scalar_select %p30, %s31, %s32
    %p36 = pneg %p30
    %p37 = scmp.eq.s32.totalorder %s9, 1
    %p38 = por %p36, %p37
    %p39 = scmp.ne.s32.totalorder %s31, %s34
    %p40 = scmp.eq.s32.totalorder %s9, 0
    %p41 = por %p39, %p40
    %p42 = scmp.ne.s32.totalorder %s31, %s34
    %p43 = scmp.eq.s32.totalorder %s14, 1
    %p44 = por %p42, %p43
    %p45 = scmp.ne.s32.totalorder %s34, %s35
    %p46 = scmp.eq.s32.totalorder %s14, 0
    %p47 = por %p45, %p46
    %p48 = scmp.ne.s32.totalorder %s34, %s35
    %p49 = scmp.eq.s32.totalorder %s15, 1
    %p50 = por %p48, %p49
    %p52 = scmp.ne.s32.totalorder %s35, %s51
    %p53 = scmp.eq.s32.totalorder %s15, 0
    %p54 = por %p52, %p53
    %s55 = ssub.s32 %s17, %s24
    %p56 = scmp.eq.s32.totalorder %s55, 0
    %s58 = sadd.s32 %s57, 1
    %s59 = scalar_select %p56, %s57, %s58
    %p62 = pneg %p56
    %p63 = scmp.eq.s32.totalorder %s9, 1
    %p64 = por %p62, %p63
    %p65 = scmp.ne.s32.totalorder %s57, %s60
    %p66 = scmp.eq.s32.totalorder %s9, 0
    %p67 = por %p65, %p66
    %p68 = scmp.ne.s32.totalorder %s57, %s60
    %p69 = scmp.eq.s32.totalorder %s14, 1
    %p70 = por %p68, %p69
    %p71 = scmp.ne.s32.totalorder %s60, %s61
    %p72 = scmp.eq.s32.totalorder %s14, 0
    %p73 = por %p71, %p72
    %p74 = scmp.ne.s32.totalorder %s60, %s61
    %p75 = scmp.eq.s32.totalorder %s15, 1
    %p76 = por %p74, %p75
    %p78 = scmp.ne.s32.totalorder %s61, %s77
    %p79 = scmp.eq.s32.totalorder %s15, 0
    %p80 = por %p78, %p79
    %s81 = ssub.s32 %s17, %s24
    %p82 = scmp.eq.s32.totalorder %s81, 0
    %s84 = sadd.s32 %s83, 1
    %s85 = scalar_select %p82, %s83, %s84
    %p88 = pneg %p82
    %p89 = scmp.eq.s32.totalorder %s9, 1
    %p90 = por %p88, %p89
    %p91 = scmp.ne.s32.totalorder %s83, %s86
    %p92 = scmp.eq.s32.totalorder %s9, 0
    %p93 = por %p91, %p92
    %p94 = scmp.ne.s32.totalorder %s83, %s86
    %p95 = scmp.eq.s32.totalorder %s14, 1
    %p96 = por %p94, %p95
    %p97 = scmp.ne.s32.totalorder %s86, %s87
    %p98 = scmp.eq.s32.totalorder %s14, 0
    %p99 = por %p97, %p98
    %p100 = scmp.ne.s32.totalorder %s86, %s87
    %p101 = scmp.eq.s32.totalorder %s15, 1
    %p102 = por %p100, %p101
    %p104 = scmp.ne.s32.totalorder %s87, %s103
    %p105 = scmp.eq.s32.totalorder %s15, 0
    %p106 = por %p104, %p105
    %s107 = ssub.s32 %s16, %s28
    %s108 = ssub.s32 %s17, %s24
    %s109 = sor.u32 %s107, %s108
    %p110 = scmp.eq.s32.totalorder %s109, 0
    %s112 = sadd.s32 %s111, 1
    %s113 = scalar_select %p110, %s111, %s112
    %p116 = pneg %p110
    %p117 = scmp.eq.s32.totalorder %s9, 1
    %p118 = por %p116, %p117
    %p119 = scmp.ne.s32.totalorder %s111, %s114
    %p120 = scmp.eq.s32.totalorder %s9, 0
    %p121 = por %p119, %p120
    %p122 = scmp.ne.s32.totalorder %s111, %s114
    %p123 = scmp.eq.s32.totalorder %s14, 1
    %p124 = por %p122, %p123
    %p125 = scmp.ne.s32.totalorder %s114, %s115
    %p126 = scmp.eq.s32.totalorder %s14, 0
    %p127 = por %p125, %p126
    %p128 = scmp.ne.s32.totalorder %s114, %s115
    %p129 = scmp.eq.s32.totalorder %s15, 1
    %p130 = por %p128, %p129
    %p132 = scmp.ne.s32.totalorder %s115, %s131
    %p133 = scmp.eq.s32.totalorder %s15, 0
    %p134 = por %p132, %p133
    %p135 = scmp.le.s32.totalorder 1, %s9
    %p136 = scmp.lt.s32.totalorder %s9, 3
    %p137 = pnand %p135, %p136
    %p138 = pneg %p137
    // Predicated region
    $region9: #{dqn_forward.4} parent=5 // pred_check
      _
    $region10: #{dqn_forward.4} parent=5 // pred_check_branch
      %140 = sbr.rel (%p137) target = $region12
    $region11: #{dqn_forward.4} parent=5 // pred_region
      %s141 = ssub.s32 %s9, 1
      // Predicated region
      $region13: #{dqn_forward.4} parent=11 // pred_check
        %p142 = pneg %p73
      $region14: #{dqn_forward.4} parent=11 // pred_check_branch
        %144 = sbr.rel (%p142) target = $region16
      $region15: #{dqn_forward.4} parent=11 // pred_region
        %p145 = scmp.lt.s32.totalorder %s19, 0
        %s146 = scalar_select %p145, %s19, 0
        %s147 = smul.addr %s146, 4
        %s148 = scalar_lea.vmem %s1, %s147
      $region16: #{dqn_forward.4} parent=11 // pred_fallthru
        _
      // Predicated region
      $region17: #{dqn_forward.4} parent=11 // pred_check
        %p149 = pneg %p99
      $region18: #{dqn_forward.4} parent=11 // pred_check_branch
        %151 = sbr.rel (%p149) target = $region20
      $region19: #{dqn_forward.4} parent=11 // pred_region
        %p152 = scmp.lt.s32.totalorder %s19, 0
        %s153 = scalar_select %p152, %s19, 0
        %s154 = scalar_lea.vmem %s2, %s153
      $region20: #{dqn_forward.4} parent=11 // pred_fallthru
        _
    $region12: #{dqn_forward.4} parent=5 // pred_fallthru
      _
    %p155 = scmp.lt.s32.totalorder %s9, 2
    // Predicated region
    $region21: #{dqn_forward.4} parent=5 // pred_check
      %p156 = pneg %p155
    $region22: #{dqn_forward.4} parent=5 // pred_check_branch
      %158 = sbr.rel (%p156) target = $region24
    $region23: #{dqn_forward.4} parent=5 // pred_region
      // Predicated region
      $region25: #{dqn_forward.4} parent=23 // pred_check
        %p159 = pneg %p41
      $region26: #{dqn_forward.4} parent=23 // pred_check_branch
        %161 = sbr.rel (%p159) target = $region28
      $region27: #{dqn_forward.4} parent=23 // pred_region
        %s162 = smul.u32 8, %s16
        %p163 = scmp.lt.s32.totalorder %s162, 15
        %s164 = scalar_select %p163, %s162, 15
        %s165 = smul.addr %s164, 2
        %s166 = smul.addr %s165, 4
        %s167 = scalar_lea.vmem %s0, %s166
        %s168 = smul.u32 8, %s16
      $region28: #{dqn_forward.4} parent=23 // pred_fallthru
        _
    $region24: #{dqn_forward.4} parent=5 // pred_fallthru
      _
    %p169 = scmp.le.s32.totalorder 1, %s9
    %p170 = scmp.lt.s32.totalorder %s9, 3
    %p171 = pnand %p169, %p170
    %p172 = pneg %p171
    // Predicated region
    $region29: #{dqn_forward.4} parent=5 // pred_check
      _
    $region30: #{dqn_forward.4} parent=5 // pred_check_branch
      %174 = sbr.rel (%p171) target = $region32
    $region31: #{dqn_forward.4} parent=5 // pred_region
      %s175 = ssub.s32 %s9, 1
      %s176 = smul.u32 8, %s18
      %p177 = scmp.lt.s32.totalorder %s176, 15
      %s178 = scalar_select %p177, %s176, 15
      %s179 = smul.addr %s178, 2
      %s180 = smul.addr %s179, 4
      %s181 = scalar_lea.vmem %s0, %s180
      %p182 = pneg %p47
      %p183 = pneg %p44
      %p184 = scmp.lt.s32.totalorder %s19, 0
      %s185 = scalar_select %p184, %s19, 0
      %s186 = smul.addr %s185, 4
      %s187 = scalar_lea.vmem %s1, %s186
      %p188 = pneg %p73
      %p189 = pneg %p70
      %p190 = scmp.lt.s32.totalorder %s19, 0
      %s191 = scalar_select %p190, %s19, 0
      %s192 = scalar_lea.vmem %s2, %s191
      %p193 = pneg %p99
      %p194 = pneg %p96
      %p195 = pneg %p127
      %p196 = pneg %p124
      %s197 = smul.u32 8, %s18
      %p198 = scmp.lt.s32.totalorder %s197, 15
      %s199 = scalar_select %p198, %s197, 15
      %p200 = scmp.lt.s32.totalorder %s19, 0
      %s201 = scalar_select %p200, %s19, 0
      %s202 = sadd.s32 %s201, %s199
      %s203 = smul.addr %s202, 4
      %s204 = scalar_lea.vmem %s3, %s203
      %s205 = smul.u32 8, %s18
      %p206 = scmp.lt.s32.totalorder %s205, 15
      %s207 = scalar_select %p206, %s205, 15
      %s208 = smul.addr %s207, 2
      %s209 = smul.addr %s208, 4
      %s210 = scalar_lea.vmem %s0, %s209
      %s211 = smul.u32 8, %s18
      %p212 = scmp.lt.s32.totalorder %s19, 0
      %s213 = scalar_select %p212, %s19, 0
      %s214 = smul.addr %s213, 4
      %s215 = scalar_lea.vmem %s1, %s214
      %p216 = scmp.lt.s32.totalorder %s19, 0
      %s217 = scalar_select %p216, %s19, 0
      %s218 = scalar_lea.vmem %s2, %s217
      %s219 = smul.u32 8, %s18
      %p220 = scmp.lt.s32.totalorder %s219, 15
      %s221 = scalar_select %p220, %s219, 15
      %p222 = scmp.lt.s32.totalorder %s19, 0
      %s223 = scalar_select %p222, %s19, 0
      %s224 = sadd.s32 %s223, %s221
      %s225 = smul.addr %s224, 4
      %s226 = scalar_lea.vmem %s3, %s225
      %s227 = smul.u32 8, %s18
      %v229 = vld [vmem:[%s210] sm:$0xff]
      %v230 = vld [vmem:[%s210 + $0x8] sm:$0xff]
      %v231 = vld [vmem:[%s210 + $0x10] sm:$0xff]
      %v232 = vld [vmem:[%s210 + $0x18] sm:$0xff]
      %v233 = vld [vmem:[%s210 + $0x20] sm:$0xff]
      %v234 = vld [vmem:[%s210 + $0x28] sm:$0xff]
      %v235 = vld [vmem:[%s210 + $0x30] sm:$0xff]
      %v236 = vld [vmem:[%s210 + $0x38] sm:$0xff]
      %v237 = vld [vmem:[%s215] sm:$0xf]
      %v238 = vld [vmem:[%s215 + $0x4] sm:$0xf]
      %v239 = vld [vmem:[%s215 + $0x8] sm:$0xf]
      %v240 = vld [vmem:[%s215 + $0xc] sm:$0xf]
      %v241 = vld [vmem:[%s215 + $0x10] sm:$0xf]
      %v242 = vld [vmem:[%s215 + $0x14] sm:$0xf]
      %v243 = vld [vmem:[%s215 + $0x18] sm:$0xf]
      %v244 = vld [vmem:[%s215 + $0x1c] sm:$0xf]
      %v245 = vld [vmem:[%s215 + $0x20] sm:$0xf]
      %v246 = vld [vmem:[%s215 + $0x24] sm:$0xf]
      %v247 = vld [vmem:[%s215 + $0x28] sm:$0xf]
      %v248 = vld [vmem:[%s215 + $0x2c] sm:$0xf]
      %v249 = vld [vmem:[%s215 + $0x30] sm:$0xf]
      %v250 = vld [vmem:[%s215 + $0x34] sm:$0xf]
      %v251 = vld [vmem:[%s215 + $0x38] sm:$0xf]
      %v252 = vld [vmem:[%s215 + $0x3c] sm:$0xf]
      %v253 = vld [vmem:[%s215 + $0x40] sm:$0xf]
      %v254 = vld [vmem:[%s215 + $0x44] sm:$0xf]
      %v255 = vld [vmem:[%s215 + $0x48] sm:$0xf]
      %v256 = vld [vmem:[%s215 + $0x4c] sm:$0xf]
      %v257 = vld [vmem:[%s215 + $0x50] sm:$0xf]
      %v258 = vld [vmem:[%s215 + $0x54] sm:$0xf]
      %v259 = vld [vmem:[%s215 + $0x58] sm:$0xf]
      %v260 = vld [vmem:[%s215 + $0x5c] sm:$0xf]
      %v261 = vld [vmem:[%s215 + $0x60] sm:$0xf]
      %v262 = vld [vmem:[%s215 + $0x64] sm:$0xf]
      %v263 = vld [vmem:[%s215 + $0x68] sm:$0xf]
      %v264 = vld [vmem:[%s215 + $0x6c] sm:$0xf]
      %v265 = vld [vmem:[%s215 + $0x70] sm:$0xf]
      %v266 = vld [vmem:[%s215 + $0x74] sm:$0xf]
      %v267 = vld [vmem:[%s215 + $0x78] sm:$0xf]
      %v268 = vld [vmem:[%s215 + $0x7c] sm:$0xf]
      %v269 = vld [vmem:[%s218] sm:$0x1]
      %v271 = vlaneseq
      %v272 = vshrl.u32 %v271, 7
      %v273 = vsub.s32 0, %v272
      %v274 = vrot.slane %v269, %v273
      %v284 = vunpack.c.l.b16 %v229
      %v285 = vunpack.c.h.b16 %v229
      %v286 = vunpack.c.l.b16 %v230
      %v287 = vunpack.c.h.b16 %v230
      %v288 = vunpack.c.l.b16 %v231
      %v289 = vunpack.c.h.b16 %v231
      %v290 = vunpack.c.l.b16 %v232
      %v291 = vunpack.c.h.b16 %v232
      %v292 = vunpack.c.l.b16 %v233
      %v293 = vunpack.c.h.b16 %v233
      %v294 = vunpack.c.l.b16 %v234
      %v295 = vunpack.c.h.b16 %v234
      %v296 = vunpack.c.l.b16 %v235
      %v297 = vunpack.c.h.b16 %v235
      %v298 = vunpack.c.l.b16 %v236
      %v299 = vunpack.c.h.b16 %v236
      %v300 = vpack.c.b16 %v286, %v284
      %v301 = vpack.c.b16 %v287, %v285
      %v302 = vpack.c.b16 %v290, %v288
      %v303 = vpack.c.b16 %v291, %v289
      %v304 = vpack.c.b16 %v294, %v292
      %v305 = vpack.c.b16 %v295, %v293
      %v306 = vpack.c.b16 %v298, %v296
      %v307 = vpack.c.b16 %v299, %v297
      %v348 = vunpack.c.l.b16 %v237
      %v349 = vunpack.c.l.b16 %v238
      %v350 = vunpack.c.l.b16 %v239
      %v351 = vunpack.c.l.b16 %v240
      %v352 = vunpack.c.l.b16 %v241
      %v353 = vunpack.c.l.b16 %v242
      %v354 = vunpack.c.l.b16 %v243
      %v355 = vunpack.c.l.b16 %v244
      %v356 = vunpack.c.l.b16 %v245
      %v357 = vunpack.c.l.b16 %v246
      %v358 = vunpack.c.l.b16 %v247
      %v359 = vunpack.c.l.b16 %v248
      %v360 = vunpack.c.l.b16 %v249
      %v361 = vunpack.c.l.b16 %v250
      %v362 = vunpack.c.l.b16 %v251
      %v363 = vunpack.c.l.b16 %v252
      %v364 = vunpack.c.l.b16 %v253
      %v365 = vunpack.c.l.b16 %v254
      %v366 = vunpack.c.l.b16 %v255
      %v367 = vunpack.c.l.b16 %v256
      %v368 = vunpack.c.l.b16 %v257
      %v369 = vunpack.c.l.b16 %v258
      %v370 = vunpack.c.l.b16 %v259
      %v371 = vunpack.c.l.b16 %v260
      %v372 = vunpack.c.l.b16 %v261
      %v373 = vunpack.c.l.b16 %v262
      %v374 = vunpack.c.l.b16 %v263
      %v375 = vunpack.c.l.b16 %v264
      %v376 = vunpack.c.l.b16 %v265
      %v377 = vunpack.c.l.b16 %v266
      %v378 = vunpack.c.l.b16 %v267
      %v379 = vunpack.c.l.b16 %v268
      %v380 = vpack.c.b16 %v349, %v348
      %v381 = vpack.c.b16 %v351, %v350
      %v382 = vpack.c.b16 %v353, %v352
      %v383 = vpack.c.b16 %v355, %v354
      %v384 = vpack.c.b16 %v357, %v356
      %v385 = vpack.c.b16 %v359, %v358
      %v386 = vpack.c.b16 %v361, %v360
      %v387 = vpack.c.b16 %v363, %v362
      %v388 = vpack.c.b16 %v365, %v364
      %v389 = vpack.c.b16 %v367, %v366
      %v390 = vpack.c.b16 %v369, %v368
      %v391 = vpack.c.b16 %v371, %v370
      %v392 = vpack.c.b16 %v373, %v372
      %v393 = vpack.c.b16 %v375, %v374
      %v394 = vpack.c.b16 %v377, %v376
      %v395 = vpack.c.b16 %v379, %v378
      %412 = vmatprep.subr.bf16.mxu0 0
      %413 = vmatpush1.bf16.msra.mxu0 %v380
      %414 = vmatprep.subr.bf16.mxu0 0
      %415 = vmatpush1.bf16.msra.mxu0 %v381
      %416 = vmatprep.subr.bf16.mxu0 0
      %417 = vmatpush1.bf16.msra.mxu0 %v382
      %418 = vmatprep.subr.bf16.mxu0 0
      %419 = vmatpush1.bf16.msra.mxu0 %v383
      %420 = vmatprep.subr.bf16.mxu0 0
      %421 = vmatpush1.bf16.msra.mxu0 %v384
      %422 = vmatprep.subr.bf16.mxu0 0
      %423 = vmatpush1.bf16.msra.mxu0 %v385
      %424 = vmatprep.subr.bf16.mxu0 0
      %425 = vmatpush1.bf16.msra.mxu0 %v386
      %426 = vmatprep.subr.bf16.mxu0 0
      %427 = vmatpush1.bf16.msra.mxu0 %v387
      %428 = vmatprep.subr.bf16.mxu0 0
      %429 = vmatpush1.bf16.msra.mxu0 %v388
      %430 = vmatprep.subr.bf16.mxu0 0
      %431 = vmatpush1.bf16.msra.mxu0 %v389
      %432 = vmatprep.subr.bf16.mxu0 0
      %433 = vmatpush1.bf16.msra.mxu0 %v390
      %434 = vmatprep.subr.bf16.mxu0 0
      %435 = vmatpush1.bf16.msra.mxu0 %v391
      %436 = vmatprep.subr.bf16.mxu0 0
      %437 = vmatpush1.bf16.msra.mxu0 %v392
      %438 = vmatprep.subr.bf16.mxu0 0
      %439 = vmatpush1.bf16.msra.mxu0 %v393
      %440 = vmatprep.subr.bf16.mxu0 0
      %441 = vmatpush1.bf16.msra.mxu0 %v394
      %442 = vmatprep.subr.bf16.mxu0 0
      %443 = vmatpush1.bf16.msra.mxu0 %v395
      %444 = vmatprep.mubr.bf16.mxu0 %v301
      %445 = vmatmul.mubr.bf16.gmra.mrb[0].mxu0 %v300
      %v446 = vpop.f32.mrb[0].mxu0
      %v447 = vadd.f32 %v274, %v446
      %v448 = vpop.f32.mrb[0].mxu0
      %v449 = vpop.f32.mrb[0].mxu0
      %v450 = vadd.f32 %v274, %v449
      %v451 = vpop.f32.mrb[0].mxu0
      %452 = vmatprep.mubr.bf16.mxu0 %v303
      %453 = vmatmul.mubr.bf16.gmra.mrb[0].mxu0 %v302
      %v454 = vpop.f32.mrb[0].mxu0
      %v455 = vadd.f32 %v274, %v454
      %v456 = vpop.f32.mrb[0].mxu0
      %v457 = vpop.f32.mrb[0].mxu0
      %v458 = vadd.f32 %v274, %v457
      %v459 = vpop.f32.mrb[0].mxu0
      %460 = vmatprep.mubr.bf16.mxu0 %v305
      %461 = vmatmul.mubr.bf16.gmra.mrb[0].mxu0 %v304
      %v462 = vpop.f32.mrb[0].mxu0
      %v463 = vadd.f32 %v274, %v462
      %v464 = vpop.f32.mrb[0].mxu0
      %v465 = vpop.f32.mrb[0].mxu0
      %v466 = vadd.f32 %v274, %v465
      %v467 = vpop.f32.mrb[0].mxu0
      %468 = vmatprep.mubr.bf16.mxu0 %v307
      %469 = vmatmul.mubr.bf16.gmra.mrb[0].mxu0 %v306
      %v470 = vpop.f32.mrb[0].mxu0
      %v471 = vadd.f32 %v274, %v470
      %v472 = vpop.f32.mrb[0].mxu0
      %v473 = vpop.f32.mrb[0].mxu0
      %v474 = vadd.f32 %v274, %v473
      %v475 = vpop.f32.mrb[0].mxu0
      %476 = vdwg.mxu0
      %v477 = vmax.f32 %v447, 0.0
      %v478 = vmax.f32 %v450, 0.0
      %v479 = vmax.f32 %v455, 0.0
      %v480 = vmax.f32 %v458, 0.0
      %v481 = vmax.f32 %v463, 0.0
      %v482 = vmax.f32 %v466, 0.0
      %v483 = vmax.f32 %v471, 0.0
      %v484 = vmax.f32 %v474, 0.0
      %v485 = vpack.c.bf16 %v478, %v477
      %v486 = vpack.c.bf16 %v480, %v479
      %v487 = vpack.c.bf16 %v482, %v481
      %v488 = vpack.c.bf16 %v484, %v483
      %v493 = vunpack.c.l.b16 %v485
      %v494 = vunpack.c.h.b16 %v485
      %v495 = vunpack.c.l.b16 %v486
      %v496 = vunpack.c.h.b16 %v486
      %v497 = vunpack.c.l.b16 %v487
      %v498 = vunpack.c.h.b16 %v487
      %v499 = vunpack.c.l.b16 %v488
      %v500 = vunpack.c.h.b16 %v488
      %v501 = vpack.c.b16 %v493, %v493
      %v502 = vpack.c.b16 %v494, %v494
      %v503 = vpack.c.b16 %v495, %v495
      %v504 = vpack.c.b16 %v496, %v496
      %v505 = vpack.c.b16 %v497, %v497
      %v506 = vpack.c.b16 %v498, %v498
      %v507 = vpack.c.b16 %v499, %v499
      %v508 = vpack.c.b16 %v500, %v500
      %517 = vst [vmem:[%s226] sm:$0xf] %v501
      %518 = vst [vmem:[%s226 + $0x4] sm:$0xf] %v502
      %519 = vst [vmem:[%s226 + $0x8] sm:$0xf] %v503
      %520 = vst [vmem:[%s226 + $0xc] sm:$0xf] %v504
      %521 = vst [vmem:[%s226 + $0x10] sm:$0xf] %v505
      %522 = vst [vmem:[%s226 + $0x14] sm:$0xf] %v506
      %523 = vst [vmem:[%s226 + $0x18] sm:$0xf] %v507
      %524 = vst [vmem:[%s226 + $0x1c] sm:$0xf] %v508
      %s525 = smul.u32 8, %s18
      %p526 = scmp.lt.s32.totalorder %s525, 15
      %s527 = scalar_select %p526, %s525, 15
      %p528 = scmp.lt.s32.totalorder %s19, 0
      %s529 = scalar_select %p528, %s19, 0
      %s530 = sadd.s32 %s529, %s527
      %s531 = smul.addr %s530, 4
      %s532 = scalar_lea.vmem %s3, %s531
      // Predicated region
      $region33: #{dqn_forward.4} parent=31 // pred_check
        %p533 = pneg %p124
      $region34: #{dqn_forward.4} parent=31 // pred_check_branch
        %535 = sbr.rel (%p533) target = $region36
      $region35: #{dqn_forward.4} parent=31 // pred_region
        %s536 = smul.u32 8, %s18
      $region36: #{dqn_forward.4} parent=31 // pred_fallthru
        _
    $region32: #{dqn_forward.4} parent=5 // pred_fallthru
      _
    %p537 = scmp.le.s32.totalorder 2, %s9
    // Predicated region
    $region37: #{dqn_forward.4} parent=5 // pred_check
      %p538 = pneg %p537
    $region38: #{dqn_forward.4} parent=5 // pred_check_branch
      %540 = sbr.rel (%p538) target = $region40
    $region39: #{dqn_forward.4} parent=5 // pred_region
      %s541 = ssub.s32 %s9, 2
      // Predicated region
      $region41: #{dqn_forward.4} parent=39 // pred_check
        %p542 = pneg %p130
      $region42: #{dqn_forward.4} parent=39 // pred_check_branch
        %544 = sbr.rel (%p542) target = $region44
      $region43: #{dqn_forward.4} parent=39 // pred_region
        %s545 = smul.u32 8, %s20
        %p546 = scmp.lt.s32.totalorder %s545, 15
        %s547 = scalar_select %p546, %s545, 15
        %p548 = scmp.lt.s32.totalorder %s21, 0
        %s549 = scalar_select %p548, %s21, 0
        %s550 = sadd.s32 %s549, %s547
        %s551 = smul.addr %s550, 4
        %s552 = scalar_lea.vmem %s3, %s551
      $region44: #{dqn_forward.4} parent=39 // pred_fallthru
        _
    $region40: #{dqn_forward.4} parent=5 // pred_fallthru
      _
  $region6: #{dqn_forward.4} parent=0 // loop_footer
    %s13 = sadd.s32 1, %s9
  $region7: #{dqn_forward.4} parent=0 // loop_footer_branch
    %8 = sbr.rel target = $region3
  $region8: #{dqn_forward.4} parent=0 // loop_exit
    _

// kernel: dqn_forward.5
$region0: #{dqn_forward.5}
  #allocation0 [shape = 'u32[]', space=smem, size = 0x4, offset = 0x4, fixed_abs, tag = 'smem constant byte address 0x4 - core index']
  #allocation1 [shape = 'u32[144,128]{1,0:T(1,128)}', space=vmem, size = 0x12000, scoped, tag = 'internal scratch']
  %s0 = inlined_call_operand.vmem [shape: bf16[32,512], index: 0, kind: input, shape index: {}]
  %s1 = inlined_call_operand.vmem [shape: bf16[512,128], index: 1, kind: input, shape index: {}]
  %s2 = inlined_call_operand.vmem [shape: f32[1,128], index: 2, kind: input, shape index: {}]
  %s3 = inlined_call_operand.vmem [shape: bf16[32,128], index: 3, kind: output, shape index: {}]
  %s4 = sld [smem:[#allocation0]]
  $region22: #{dqn_forward.5} parent=0
    _
  %s6 = ssub.s32 1, %s4
  %s7 = scalar_select 0, %s6, %s4
  // Predicated region
  $region2: #{dqn_forward.5} parent=0 // pred_check
    _
  $region3: #{dqn_forward.5} parent=0 // pred_check_branch
    %9 = sbr.rel (0) target = $region5
  $region4: #{dqn_forward.5} parent=0 // pred_region
    _
  $region5: #{dqn_forward.5} parent=0 // pred_fallthru
    _
  // Predicated region
  $region6: #{dqn_forward.5} parent=0 // pred_check
    _
  $region7: #{dqn_forward.5} parent=0 // pred_check_branch
    %11 = sbr.rel (0) target = $region9
  $region8: #{dqn_forward.5} parent=0 // pred_region
    _
  $region9: #{dqn_forward.5} parent=0 // pred_fallthru
    _
  // Predicated region
  $region10: #{dqn_forward.5} parent=0 // pred_check
    _
  $region11: #{dqn_forward.5} parent=0 // pred_check_branch
    %13 = sbr.rel (0) target = $region13
  $region12: #{dqn_forward.5} parent=0 // pred_region
    _
  $region13: #{dqn_forward.5} parent=0 // pred_fallthru
    _
  %v15 = vld [vmem:[%s0] sm:$0xff]
  %v16 = vld [vmem:[%s0 + $0x8] sm:$0xff]
  %v17 = vld [vmem:[%s0 + $0x10] sm:$0xff]
  %v18 = vld [vmem:[%s0 + $0x18] sm:$0xff]
  %v19 = vld [vmem:[%s0 + $0x20] sm:$0xff]
  %v20 = vld [vmem:[%s0 + $0x28] sm:$0xff]
  %v21 = vld [vmem:[%s0 + $0x30] sm:$0xff]
  %v22 = vld [vmem:[%s0 + $0x38] sm:$0xff]
  %v23 = vld [vmem:[%s1] sm:$0xf]
  %v24 = vld [vmem:[%s1 + $0x4] sm:$0xf]
  %v25 = vld [vmem:[%s1 + $0x8] sm:$0xf]
  %v26 = vld [vmem:[%s1 + $0xc] sm:$0xf]
  %v27 = vld [vmem:[%s1 + $0x10] sm:$0xf]
  %v28 = vld [vmem:[%s1 + $0x14] sm:$0xf]
  %v29 = vld [vmem:[%s1 + $0x18] sm:$0xf]
  %v30 = vld [vmem:[%s1 + $0x1c] sm:$0xf]
  %v31 = vld [vmem:[%s1 + $0x20] sm:$0xf]
  %v32 = vld [vmem:[%s1 + $0x24] sm:$0xf]
  %v33 = vld [vmem:[%s1 + $0x28] sm:$0xf]
  %v34 = vld [vmem:[%s1 + $0x2c] sm:$0xf]
  %v35 = vld [vmem:[%s1 + $0x30] sm:$0xf]
  %v36 = vld [vmem:[%s1 + $0x34] sm:$0xf]
  %v37 = vld [vmem:[%s1 + $0x38] sm:$0xf]
  %v38 = vld [vmem:[%s1 + $0x3c] sm:$0xf]
  %v39 = vld [vmem:[%s1 + $0x40] sm:$0xf]
  %v40 = vld [vmem:[%s1 + $0x44] sm:$0xf]
  %v41 = vld [vmem:[%s1 + $0x48] sm:$0xf]
  %v42 = vld [vmem:[%s1 + $0x4c] sm:$0xf]
  %v43 = vld [vmem:[%s1 + $0x50] sm:$0xf]
  %v44 = vld [vmem:[%s1 + $0x54] sm:$0xf]
  %v45 = vld [vmem:[%s1 + $0x58] sm:$0xf]
  %v46 = vld [vmem:[%s1 + $0x5c] sm:$0xf]
  %v47 = vld [vmem:[%s1 + $0x60] sm:$0xf]
  %v48 = vld [vmem:[%s1 + $0x64] sm:$0xf]
  %v49 = vld [vmem:[%s1 + $0x68] sm:$0xf]
  %v50 = vld [vmem:[%s1 + $0x6c] sm:$0xf]
  %v51 = vld [vmem:[%s1 + $0x70] sm:$0xf]
  %v52 = vld [vmem:[%s1 + $0x74] sm:$0xf]
  %v53 = vld [vmem:[%s1 + $0x78] sm:$0xf]
  %v54 = vld [vmem:[%s1 + $0x7c] sm:$0xf]
  %v55 = vld [vmem:[%s1 + $0x80] sm:$0xf]
  %v56 = vld [vmem:[%s1 + $0x84] sm:$0xf]
  %v57 = vld [vmem:[%s1 + $0x88] sm:$0xf]
  %v58 = vld [vmem:[%s1 + $0x8c] sm:$0xf]
  %v59 = vld [vmem:[%s1 + $0x90] sm:$0xf]
  %v60 = vld [vmem:[%s1 + $0x94] sm:$0xf]
  %v61 = vld [vmem:[%s1 + $0x98] sm:$0xf]
  %v62 = vld [vmem:[%s1 + $0x9c] sm:$0xf]
  %v63 = vld [vmem:[%s1 + $0xa0] sm:$0xf]
  %v64 = vld [vmem:[%s1 + $0xa4] sm:$0xf]
  %v65 = vld [vmem:[%s1 + $0xa8] sm:$0xf]
  %v66 = vld [vmem:[%s1 + $0xac] sm:$0xf]
  %v67 = vld [vmem:[%s1 + $0xb0] sm:$0xf]
  %v68 = vld [vmem:[%s1 + $0xb4] sm:$0xf]
  %v69 = vld [vmem:[%s1 + $0xb8] sm:$0xf]
  %v70 = vld [vmem:[%s1 + $0xbc] sm:$0xf]
  %v71 = vld [vmem:[%s1 + $0xc0] sm:$0xf]
  %v72 = vld [vmem:[%s1 + $0xc4] sm:$0xf]
  %v73 = vld [vmem:[%s1 + $0xc8] sm:$0xf]
  %v74 = vld [vmem:[%s1 + $0xcc] sm:$0xf]
  %v75 = vld [vmem:[%s1 + $0xd0] sm:$0xf]
  %v76 = vld [vmem:[%s1 + $0xd4] sm:$0xf]
  %v77 = vld [vmem:[%s1 + $0xd8] sm:$0xf]
  %v78 = vld [vmem:[%s1 + $0xdc] sm:$0xf]
  %v79 = vld [vmem:[%s1 + $0xe0] sm:$0xf]
  %v80 = vld [vmem:[%s1 + $0xe4] sm:$0xf]
  %v81 = vld [vmem:[%s1 + $0xe8] sm:$0xf]
  %v82 = vld [vmem:[%s1 + $0xec] sm:$0xf]
  %v83 = vld [vmem:[%s1 + $0xf0] sm:$0xf]
  %v84 = vld [vmem:[%s1 + $0xf4] sm:$0xf]
  %v85 = vld [vmem:[%s1 + $0xf8] sm:$0xf]
  %v86 = vld [vmem:[%s1 + $0xfc] sm:$0xf]
  %v87 = vld [vmem:[%s2] sm:$0x1]
  %v89 = vlaneseq
  %v90 = vshrl.u32 %v89, 7
  %v91 = vsub.s32 0, %v90
  %v92 = vrot.slane %v87, %v91
  %v102 = vunpack.c.l.b16 %v15
  %v103 = vunpack.c.h.b16 %v15
  %v104 = vunpack.c.l.b16 %v16
  %v105 = vunpack.c.h.b16 %v16
  %v106 = vunpack.c.l.b16 %v17
  %v107 = vunpack.c.h.b16 %v17
  %v108 = vunpack.c.l.b16 %v18
  %v109 = vunpack.c.h.b16 %v18
  %v110 = vunpack.c.l.b16 %v19
  %v111 = vunpack.c.h.b16 %v19
  %v112 = vunpack.c.l.b16 %v20
  %v113 = vunpack.c.h.b16 %v20
  %v114 = vunpack.c.l.b16 %v21
  %v115 = vunpack.c.h.b16 %v21
  %v116 = vunpack.c.l.b16 %v22
  %v117 = vunpack.c.h.b16 %v22
  %v118 = vpack.c.b16 %v106, %v102
  %v119 = vpack.c.b16 %v107, %v103
  %v120 = vpack.c.b16 %v108, %v104
  %v121 = vpack.c.b16 %v109, %v105
  %v122 = vpack.c.b16 %v114, %v110
  %v123 = vpack.c.b16 %v115, %v111
  %v124 = vpack.c.b16 %v116, %v112
  %v125 = vpack.c.b16 %v117, %v113
  %v198 = vunpack.c.l.b16 %v23
  %v199 = vunpack.c.l.b16 %v24
  %v200 = vunpack.c.l.b16 %v25
  %v201 = vunpack.c.l.b16 %v26
  %v202 = vunpack.c.l.b16 %v27
  %v203 = vunpack.c.l.b16 %v28
  %v204 = vunpack.c.l.b16 %v29
  %v205 = vunpack.c.l.b16 %v30
  %v206 = vunpack.c.l.b16 %v31
  %v207 = vunpack.c.l.b16 %v32
  %v208 = vunpack.c.l.b16 %v33
  %v209 = vunpack.c.l.b16 %v34
  %v210 = vunpack.c.l.b16 %v35
  %v211 = vunpack.c.l.b16 %v36
  %v212 = vunpack.c.l.b16 %v37
  %v213 = vunpack.c.l.b16 %v38
  %v214 = vunpack.c.l.b16 %v39
  %v215 = vunpack.c.l.b16 %v40
  %v216 = vunpack.c.l.b16 %v41
  %v217 = vunpack.c.l.b16 %v42
  %v218 = vunpack.c.l.b16 %v43
  %v219 = vunpack.c.l.b16 %v44
  %v220 = vunpack.c.l.b16 %v45
  %v221 = vunpack.c.l.b16 %v46
  %v222 = vunpack.c.l.b16 %v47
  %v223 = vunpack.c.l.b16 %v48
  %v224 = vunpack.c.l.b16 %v49
  %v225 = vunpack.c.l.b16 %v50
  %v226 = vunpack.c.l.b16 %v51
  %v227 = vunpack.c.l.b16 %v52
  %v228 = vunpack.c.l.b16 %v53
  %v229 = vunpack.c.l.b16 %v54
  %v230 = vunpack.c.l.b16 %v55
  %v231 = vunpack.c.l.b16 %v56
  %v232 = vunpack.c.l.b16 %v57
  %v233 = vunpack.c.l.b16 %v58
  %v234 = vunpack.c.l.b16 %v59
  %v235 = vunpack.c.l.b16 %v60
  %v236 = vunpack.c.l.b16 %v61
  %v237 = vunpack.c.l.b16 %v62
  %v238 = vunpack.c.l.b16 %v63
  %v239 = vunpack.c.l.b16 %v64
  %v240 = vunpack.c.l.b16 %v65
  %v241 = vunpack.c.l.b16 %v66
  %v242 = vunpack.c.l.b16 %v67
  %v243 = vunpack.c.l.b16 %v68
  %v244 = vunpack.c.l.b16 %v69
  %v245 = vunpack.c.l.b16 %v70
  %v246 = vunpack.c.l.b16 %v71
  %v247 = vunpack.c.l.b16 %v72
  %v248 = vunpack.c.l.b16 %v73
  %v249 = vunpack.c.l.b16 %v74
  %v250 = vunpack.c.l.b16 %v75
  %v251 = vunpack.c.l.b16 %v76
  %v252 = vunpack.c.l.b16 %v77
  %v253 = vunpack.c.l.b16 %v78
  %v254 = vunpack.c.l.b16 %v79
  %v255 = vunpack.c.l.b16 %v80
  %v256 = vunpack.c.l.b16 %v81
  %v257 = vunpack.c.l.b16 %v82
  %v258 = vunpack.c.l.b16 %v83
  %v259 = vunpack.c.l.b16 %v84
  %v260 = vunpack.c.l.b16 %v85
  %v261 = vunpack.c.l.b16 %v86
  %v262 = vpack.c.b16 %v199, %v198
  %v263 = vpack.c.b16 %v201, %v200
  %v264 = vpack.c.b16 %v203, %v202
  %v265 = vpack.c.b16 %v205, %v204
  %v266 = vpack.c.b16 %v207, %v206
  %v267 = vpack.c.b16 %v209, %v208
  %v268 = vpack.c.b16 %v211, %v210
  %v269 = vpack.c.b16 %v213, %v212
  %v270 = vpack.c.b16 %v215, %v214
  %v271 = vpack.c.b16 %v217, %v216
  %v272 = vpack.c.b16 %v219, %v218
  %v273 = vpack.c.b16 %v221, %v220
  %v274 = vpack.c.b16 %v223, %v222
  %v275 = vpack.c.b16 %v225, %v224
  %v276 = vpack.c.b16 %v227, %v226
  %v277 = vpack.c.b16 %v229, %v228
  %v278 = vpack.c.b16 %v231, %v230
  %v279 = vpack.c.b16 %v233, %v232
  %v280 = vpack.c.b16 %v235, %v234
  %v281 = vpack.c.b16 %v237, %v236
  %v282 = vpack.c.b16 %v239, %v238
  %v283 = vpack.c.b16 %v241, %v240
  %v284 = vpack.c.b16 %v243, %v242
  %v285 = vpack.c.b16 %v245, %v244
  %v286 = vpack.c.b16 %v247, %v246
  %v287 = vpack.c.b16 %v249, %v248
  %v288 = vpack.c.b16 %v251, %v250
  %v289 = vpack.c.b16 %v253, %v252
  %v290 = vpack.c.b16 %v255, %v254
  %v291 = vpack.c.b16 %v257, %v256
  %v292 = vpack.c.b16 %v259, %v258
  %v293 = vpack.c.b16 %v261, %v260
  %326 = vmatprep.subr.bf16.mxu0 0
  %327 = vmatpush1.bf16.msra.mxu0 %v262
  %328 = vmatprep.subr.bf16.mxu0 0
  %329 = vmatpush1.bf16.msra.mxu0 %v263
  %330 = vmatprep.subr.bf16.mxu0 0
  %331 = vmatpush1.bf16.msra.mxu0 %v264
  %332 = vmatprep.subr.bf16.mxu0 0
  %333 = vmatpush1.bf16.msra.mxu0 %v265
  %334 = vmatprep.subr.bf16.mxu0 0
  %335 = vmatpush1.bf16.msra.mxu0 %v266
  %336 = vmatprep.subr.bf16.mxu0 0
  %337 = vmatpush1.bf16.msra.mxu0 %v267
  %338 = vmatprep.subr.bf16.mxu0 0
  %339 = vmatpush1.bf16.msra.mxu0 %v268
  %340 = vmatprep.subr.bf16.mxu0 0
  %341 = vmatpush1.bf16.msra.mxu0 %v269
  %342 = vmatprep.subr.bf16.mxu0 0
  %343 = vmatpush1.bf16.msra.mxu0 %v270
  %344 = vmatprep.subr.bf16.mxu0 0
  %345 = vmatpush1.bf16.msra.mxu0 %v271
  %346 = vmatprep.subr.bf16.mxu0 0
  %347 = vmatpush1.bf16.msra.mxu0 %v272
  %348 = vmatprep.subr.bf16.mxu0 0
  %349 = vmatpush1.bf16.msra.mxu0 %v273
  %350 = vmatprep.subr.bf16.mxu0 0
  %351 = vmatpush1.bf16.msra.mxu0 %v274
  %352 = vmatprep.subr.bf16.mxu0 0
  %353 = vmatpush1.bf16.msra.mxu0 %v275
  %354 = vmatprep.subr.bf16.mxu0 0
  %355 = vmatpush1.bf16.msra.mxu0 %v276
  %356 = vmatprep.subr.bf16.mxu0 0
  %357 = vmatpush1.bf16.msra.mxu0 %v277
  %358 = vmatprep.mubr.bf16.mxu0 %v119
  %359 = vmatmul.mubr.bf16.gmra.mrb[0].mxu0 %v118
  %v360 = vpop.f32.mrb[0].mxu0
  %v361 = vadd.f32 %v92, %v360
  %v362 = vpop.f32.mrb[0].mxu0
  %v363 = vpop.f32.mrb[0].mxu0
  %v364 = vadd.f32 %v92, %v363
  %v365 = vpop.f32.mrb[0].mxu0
  %366 = vmatprep.mubr.bf16.mxu0 %v123
  %367 = vmatmul.mubr.bf16.gmra.mrb[0].mxu0 %v122
  %v368 = vpop.f32.mrb[0].mxu0
  %v369 = vadd.f32 %v92, %v368
  %v370 = vpop.f32.mrb[0].mxu0
  %v371 = vpop.f32.mrb[0].mxu0
  %v372 = vadd.f32 %v92, %v371
  %v373 = vpop.f32.mrb[0].mxu0
  %374 = vdwg.mxu0
  %375 = vmatprep.subr.bf16.mxu0 0
  %376 = vmatpush1.bf16.msra.mxu0 %v278
  %377 = vmatprep.subr.bf16.mxu0 0
  %378 = vmatpush1.bf16.msra.mxu0 %v279
  %379 = vmatprep.subr.bf16.mxu0 0
  %380 = vmatpush1.bf16.msra.mxu0 %v280
  %381 = vmatprep.subr.bf16.mxu0 0
  %382 = vmatpush1.bf16.msra.mxu0 %v281
  %383 = vmatprep.subr.bf16.mxu0 0
  %384 = vmatpush1.bf16.msra.mxu0 %v282
  %385 = vmatprep.subr.bf16.mxu0 0
  %386 = vmatpush1.bf16.msra.mxu0 %v283
  %387 = vmatprep.subr.bf16.mxu0 0
  %388 = vmatpush1.bf16.msra.mxu0 %v284
  %389 = vmatprep.subr.bf16.mxu0 0
  %390 = vmatpush1.bf16.msra.mxu0 %v285
  %391 = vmatprep.subr.bf16.mxu0 0
  %392 = vmatpush1.bf16.msra.mxu0 %v286
  %393 = vmatprep.subr.bf16.mxu0 0
  %394 = vmatpush1.bf16.msra.mxu0 %v287
  %395 = vmatprep.subr.bf16.mxu0 0
  %396 = vmatpush1.bf16.msra.mxu0 %v288
  %397 = vmatprep.subr.bf16.mxu0 0
  %398 = vmatpush1.bf16.msra.mxu0 %v289
  %399 = vmatprep.subr.bf16.mxu0 0
  %400 = vmatpush1.bf16.msra.mxu0 %v290
  %401 = vmatprep.subr.bf16.mxu0 0
  %402 = vmatpush1.bf16.msra.mxu0 %v291
  %403 = vmatprep.subr.bf16.mxu0 0
  %404 = vmatpush1.bf16.msra.mxu0 %v292
  %405 = vmatprep.subr.bf16.mxu0 0
  %406 = vmatpush1.bf16.msra.mxu0 %v293
  %407 = vmatprep.mubr.bf16.mxu0 %v121
  %408 = vmatmul.mubr.bf16.gmra.mrb[0].mxu0 %v120
  %v409 = vpop.f32.mrb[0].mxu0
  %v410 = vadd.f32 %v361, %v409
  %v411 = vpop.f32.mrb[0].mxu0
  %v412 = vpop.f32.mrb[0].mxu0
  %v413 = vadd.f32 %v364, %v412
  %v414 = vpop.f32.mrb[0].mxu0
  %415 = vmatprep.mubr.bf16.mxu0 %v125
  %416 = vmatmul.mubr.bf16.gmra.mrb[0].mxu0 %v124
  %v417 = vpop.f32.mrb[0].mxu0
  %v418 = vadd.f32 %v369, %v417
  %v419 = vpop.f32.mrb[0].mxu0
  %v420 = vpop.f32.mrb[0].mxu0
  %v421 = vadd.f32 %v372, %v420
  %v422 = vpop.f32.mrb[0].mxu0
  %423 = vdwg.mxu0
  %v424 = vmax.f32 %v410, 0.0
  %v425 = vmax.f32 %v413, 0.0
  %v426 = vmax.f32 %v418, 0.0
  %v427 = vmax.f32 %v421, 0.0
  %v428 = vpack.c.bf16 %v425, %v424
  %v429 = vpack.c.bf16 %v427, %v426
  %v432 = vunpack.c.l.b16 %v428
  %v433 = vunpack.c.h.b16 %v428
  %v434 = vunpack.c.l.b16 %v429
  %v435 = vunpack.c.h.b16 %v429
  %v436 = vpack.c.b16 %v432, %v432
  %v437 = vpack.c.b16 %v433, %v433
  %v438 = vpack.c.b16 %v434, %v434
  %v439 = vpack.c.b16 %v435, %v435
  %444 = vst [vmem:[%s3] sm:$0xf] %v436
  %445 = vst [vmem:[%s3 + $0x4] sm:$0xf] %v437
  %446 = vst [vmem:[%s3 + $0x8] sm:$0xf] %v438
  %447 = vst [vmem:[%s3 + $0xc] sm:$0xf] %v439
  // Predicated region
  $region14: #{dqn_forward.5} parent=0 // pred_check
    _
  $region15: #{dqn_forward.5} parent=0 // pred_check_branch
    %449 = sbr.rel (0) target = $region17
  $region16: #{dqn_forward.5} parent=0 // pred_region
    _
  $region17: #{dqn_forward.5} parent=0 // pred_fallthru
    _
  // Predicated region
  $region18: #{dqn_forward.5} parent=0 // pred_check
    _
  $region19: #{dqn_forward.5} parent=0 // pred_check_branch
    %451 = sbr.rel (0) target = $region21
  $region20: #{dqn_forward.5} parent=0 // pred_region
    _
  $region21: #{dqn_forward.5} parent=0 // pred_fallthru
    _

// kernel: dqn_forward.6
$region0: #{dqn_forward.6}
  #allocation0 [shape = 'u32[]', space=smem, size = 0x4, offset = 0x4, fixed_abs, tag = 'smem constant byte address 0x4 - core index']
  #allocation1 [shape = 'u32[144,128]{1,0:T(1,128)}', space=vmem, size = 0x12000, scoped, tag = 'internal scratch']
  %s0 = inlined_call_operand.vmem [shape: bf16[16,640], index: 0, kind: input, shape index: {}]
  %s1 = inlined_call_operand.vmem [shape: bf16[640,128], index: 1, kind: input, shape index: {}]
  %s2 = inlined_call_operand.vmem [shape: f32[1,128], index: 2, kind: input, shape index: {}]
  %s3 = inlined_call_operand.vmem [shape: bf16[16,128], index: 3, kind: output, shape index: {}]
  %s4 = sld [smem:[#allocation0]]
  $region22: #{dqn_forward.6} parent=0
    _
  %s6 = ssub.s32 1, %s4
  %s7 = scalar_select 0, %s6, %s4
  // Predicated region
  $region2: #{dqn_forward.6} parent=0 // pred_check
    _
  $region3: #{dqn_forward.6} parent=0 // pred_check_branch
    %9 = sbr.rel (0) target = $region5
  $region4: #{dqn_forward.6} parent=0 // pred_region
    _
  $region5: #{dqn_forward.6} parent=0 // pred_fallthru
    _
  // Predicated region
  $region6: #{dqn_forward.6} parent=0 // pred_check
    _
  $region7: #{dqn_forward.6} parent=0 // pred_check_branch
    %11 = sbr.rel (0) target = $region9
  $region8: #{dqn_forward.6} parent=0 // pred_region
    _
  $region9: #{dqn_forward.6} parent=0 // pred_fallthru
    _
  // Predicated region
  $region10: #{dqn_forward.6} parent=0 // pred_check
    _
  $region11: #{dqn_forward.6} parent=0 // pred_check_branch
    %13 = sbr.rel (0) target = $region13
  $region12: #{dqn_forward.6} parent=0 // pred_region
    _
  $region13: #{dqn_forward.6} parent=0 // pred_fallthru
    _
  %v15 = vld [vmem:[%s0] sm:$0xff]
  %v16 = vld [vmem:[%s0 + $0x8] sm:$0xff]
  %v17 = vld [vmem:[%s0 + $0x10] sm:$0xf]
  %v18 = vld [vmem:[%s0 + $0x14] sm:$0xff]
  %v19 = vld [vmem:[%s0 + $0x1c] sm:$0xff]
  %v20 = vld [vmem:[%s0 + $0x24] sm:$0xf]
  %v21 = vld [vmem:[%s1] sm:$0xf]
  %v22 = vld [vmem:[%s1 + $0x4] sm:$0xf]
  %v23 = vld [vmem:[%s1 + $0x8] sm:$0xf]
  %v24 = vld [vmem:[%s1 + $0xc] sm:$0xf]
  %v25 = vld [vmem:[%s1 + $0x10] sm:$0xf]
  %v26 = vld [vmem:[%s1 + $0x14] sm:$0xf]
  %v27 = vld [vmem:[%s1 + $0x18] sm:$0xf]
  %v28 = vld [vmem:[%s1 + $0x1c] sm:$0xf]
  %v29 = vld [vmem:[%s1 + $0x20] sm:$0xf]
  %v30 = vld [vmem:[%s1 + $0x24] sm:$0xf]
  %v31 = vld [vmem:[%s1 + $0x28] sm:$0xf]
  %v32 = vld [vmem:[%s1 + $0x2c] sm:$0xf]
  %v33 = vld [vmem:[%s1 + $0x30] sm:$0xf]
  %v34 = vld [vmem:[%s1 + $0x34] sm:$0xf]
  %v35 = vld [vmem:[%s1 + $0x38] sm:$0xf]
  %v36 = vld [vmem:[%s1 + $0x3c] sm:$0xf]
  %v37 = vld [vmem:[%s1 + $0x40] sm:$0xf]
  %v38 = vld [vmem:[%s1 + $0x44] sm:$0xf]
  %v39 = vld [vmem:[%s1 + $0x48] sm:$0xf]
  %v40 = vld [vmem:[%s1 + $0x4c] sm:$0xf]
  %v41 = vld [vmem:[%s1 + $0x50] sm:$0xf]
  %v42 = vld [vmem:[%s1 + $0x54] sm:$0xf]
  %v43 = vld [vmem:[%s1 + $0x58] sm:$0xf]
  %v44 = vld [vmem:[%s1 + $0x5c] sm:$0xf]
  %v45 = vld [vmem:[%s1 + $0x60] sm:$0xf]
  %v46 = vld [vmem:[%s1 + $0x64] sm:$0xf]
  %v47 = vld [vmem:[%s1 + $0x68] sm:$0xf]
  %v48 = vld [vmem:[%s1 + $0x6c] sm:$0xf]
  %v49 = vld [vmem:[%s1 + $0x70] sm:$0xf]
  %v50 = vld [vmem:[%s1 + $0x74] sm:$0xf]
  %v51 = vld [vmem:[%s1 + $0x78] sm:$0xf]
  %v52 = vld [vmem:[%s1 + $0x7c] sm:$0xf]
  %v53 = vld [vmem:[%s1 + $0x80] sm:$0xf]
  %v54 = vld [vmem:[%s1 + $0x84] sm:$0xf]
  %v55 = vld [vmem:[%s1 + $0x88] sm:$0xf]
  %v56 = vld [vmem:[%s1 + $0x8c] sm:$0xf]
  %v57 = vld [vmem:[%s1 + $0x90] sm:$0xf]
  %v58 = vld [vmem:[%s1 + $0x94] sm:$0xf]
  %v59 = vld [vmem:[%s1 + $0x98] sm:$0xf]
  %v60 = vld [vmem:[%s1 + $0x9c] sm:$0xf]
  %v61 = vld [vmem:[%s1 + $0xa0] sm:$0xf]
  %v62 = vld [vmem:[%s1 + $0xa4] sm:$0xf]
  %v63 = vld [vmem:[%s1 + $0xa8] sm:$0xf]
  %v64 = vld [vmem:[%s1 + $0xac] sm:$0xf]
  %v65 = vld [vmem:[%s1 + $0xb0] sm:$0xf]
  %v66 = vld [vmem:[%s1 + $0xb4] sm:$0xf]
  %v67 = vld [vmem:[%s1 + $0xb8] sm:$0xf]
  %v68 = vld [vmem:[%s1 + $0xbc] sm:$0xf]
  %v69 = vld [vmem:[%s1 + $0xc0] sm:$0xf]
  %v70 = vld [vmem:[%s1 + $0xc4] sm:$0xf]
  %v71 = vld [vmem:[%s1 + $0xc8] sm:$0xf]
  %v72 = vld [vmem:[%s1 + $0xcc] sm:$0xf]
  %v73 = vld [vmem:[%s1 + $0xd0] sm:$0xf]
  %v74 = vld [vmem:[%s1 + $0xd4] sm:$0xf]
  %v75 = vld [vmem:[%s1 + $0xd8] sm:$0xf]
  %v76 = vld [vmem:[%s1 + $0xdc] sm:$0xf]
  %v77 = vld [vmem:[%s1 + $0xe0] sm:$0xf]
  %v78 = vld [vmem:[%s1 + $0xe4] sm:$0xf]
  %v79 = vld [vmem:[%s1 + $0xe8] sm:$0xf]
  %v80 = vld [vmem:[%s1 + $0xec] sm:$0xf]
  %v81 = vld [vmem:[%s1 + $0xf0] sm:$0xf]
  %v82 = vld [vmem:[%s1 + $0xf4] sm:$0xf]
  %v83 = vld [vmem:[%s1 + $0xf8] sm:$0xf]
  %v84 = vld [vmem:[%s1 + $0xfc] sm:$0xf]
  %v85 = vld [vmem:[%s1 + $0x100] sm:$0xf]
  %v86 = vld [vmem:[%s1 + $0x104] sm:$0xf]
  %v87 = vld [vmem:[%s1 + $0x108] sm:$0xf]
  %v88 = vld [vmem:[%s1 + $0x10c] sm:$0xf]
  %v89 = vld [vmem:[%s1 + $0x110] sm:$0xf]
  %v90 = vld [vmem:[%s1 + $0x114] sm:$0xf]
  %v91 = vld [vmem:[%s1 + $0x118] sm:$0xf]
  %v92 = vld [vmem:[%s1 + $0x11c] sm:$0xf]
  %v93 = vld [vmem:[%s1 + $0x120] sm:$0xf]
  %v94 = vld [vmem:[%s1 + $0x124] sm:$0xf]
  %v95 = vld [vmem:[%s1 + $0x128] sm:$0xf]
  %v96 = vld [vmem:[%s1 + $0x12c] sm:$0xf]
  %v97 = vld [vmem:[%s1 + $0x130] sm:$0xf]
  %v98 = vld [vmem:[%s1 + $0x134] sm:$0xf]
  %v99 = vld [vmem:[%s1 + $0x138] sm:$0xf]
  %v100 = vld [vmem:[%s1 + $0x13c] sm:$0xf]
  %v101 = vld [vmem:[%s2] sm:$0x1]
  %v103 = vlaneseq
  %v104 = vshrl.u32 %v103, 7
  %v105 = vsub.s32 0, %v104
  %v106 = vrot.slane %v101, %v105
  %v114 = vunpack.c.l.b16 %v15
  %v115 = vunpack.c.h.b16 %v15
  %v116 = vunpack.c.l.b16 %v16
  %v117 = vunpack.c.h.b16 %v16
  %v118 = vunpack.c.l.b16 %v17
  %v119 = vunpack.c.l.b16 %v18
  %v120 = vunpack.c.h.b16 %v18
  %v121 = vunpack.c.l.b16 %v19
  %v122 = vunpack.c.h.b16 %v19
  %v123 = vunpack.c.l.b16 %v20
  %v124 = vpack.c.b16 %v119, %v114
  %v125 = vpack.c.b16 %v120, %v115
  %v126 = vpack.c.b16 %v121, %v116
  %v127 = vpack.c.b16 %v122, %v117
  %v128 = vpack.c.b16 %v123, %v118
  %v214 = vunpack.c.l.b16 %v21
  %v215 = vunpack.c.l.b16 %v22
  %v216 = vunpack.c.l.b16 %v23
  %v217 = vunpack.c.l.b16 %v24
  %v218 = vunpack.c.l.b16 %v25
  %v219 = vunpack.c.l.b16 %v26
  %v220 = vunpack.c.l.b16 %v27
  %v221 = vunpack.c.l.b16 %v28
  %v222 = vunpack.c.l.b16 %v29
  %v223 = vunpack.c.l.b16 %v30
  %v224 = vunpack.c.l.b16 %v31
  %v225 = vunpack.c.l.b16 %v32
  %v226 = vunpack.c.l.b16 %v33
  %v227 = vunpack.c.l.b16 %v34
  %v228 = vunpack.c.l.b16 %v35
  %v229 = vunpack.c.l.b16 %v36
  %v230 = vunpack.c.l.b16 %v37
  %v231 = vunpack.c.l.b16 %v38
  %v232 = vunpack.c.l.b16 %v39
  %v233 = vunpack.c.l.b16 %v40
  %v234 = vunpack.c.l.b16 %v41
  %v235 = vunpack.c.l.b16 %v42
  %v236 = vunpack.c.l.b16 %v43
  %v237 = vunpack.c.l.b16 %v44
  %v238 = vunpack.c.l.b16 %v45
  %v239 = vunpack.c.l.b16 %v46
  %v240 = vunpack.c.l.b16 %v47
  %v241 = vunpack.c.l.b16 %v48
  %v242 = vunpack.c.l.b16 %v49
  %v243 = vunpack.c.l.b16 %v50
  %v244 = vunpack.c.l.b16 %v51
  %v245 = vunpack.c.l.b16 %v52
  %v246 = vunpack.c.l.b16 %v53
  %v247 = vunpack.c.l.b16 %v54
  %v248 = vunpack.c.l.b16 %v55
  %v249 = vunpack.c.l.b16 %v56
  %v250 = vunpack.c.l.b16 %v57
  %v251 = vunpack.c.l.b16 %v58
  %v252 = vunpack.c.l.b16 %v59
  %v253 = vunpack.c.l.b16 %v60
  %v254 = vunpack.c.l.b16 %v61
  %v255 = vunpack.c.l.b16 %v62
  %v256 = vunpack.c.l.b16 %v63
  %v257 = vunpack.c.l.b16 %v64
  %v258 = vunpack.c.l.b16 %v65
  %v259 = vunpack.c.l.b16 %v66
  %v260 = vunpack.c.l.b16 %v67
  %v261 = vunpack.c.l.b16 %v68
  %v262 = vunpack.c.l.b16 %v69
  %v263 = vunpack.c.l.b16 %v70
  %v264 = vunpack.c.l.b16 %v71
  %v265 = vunpack.c.l.b16 %v72
  %v266 = vunpack.c.l.b16 %v73
  %v267 = vunpack.c.l.b16 %v74
  %v268 = vunpack.c.l.b16 %v75
  %v269 = vunpack.c.l.b16 %v76
  %v270 = vunpack.c.l.b16 %v77
  %v271 = vunpack.c.l.b16 %v78
  %v272 = vunpack.c.l.b16 %v79
  %v273 = vunpack.c.l.b16 %v80
  %v274 = vunpack.c.l.b16 %v81
  %v275 = vunpack.c.l.b16 %v82
  %v276 = vunpack.c.l.b16 %v83
  %v277 = vunpack.c.l.b16 %v84
  %v278 = vunpack.c.l.b16 %v85
  %v279 = vunpack.c.l.b16 %v86
  %v280 = vunpack.c.l.b16 %v87
  %v281 = vunpack.c.l.b16 %v88
  %v282 = vunpack.c.l.b16 %v89
  %v283 = vunpack.c.l.b16 %v90
  %v284 = vunpack.c.l.b16 %v91
  %v285 = vunpack.c.l.b16 %v92
  %v286 = vunpack.c.l.b16 %v93
  %v287 = vunpack.c.l.b16 %v94
  %v288 = vunpack.c.l.b16 %v95
  %v289 = vunpack.c.l.b16 %v96
  %v290 = vunpack.c.l.b16 %v97
  %v291 = vunpack.c.l.b16 %v98
  %v292 = vunpack.c.l.b16 %v99
  %v293 = vunpack.c.l.b16 %v100
  %v294 = vpack.c.b16 %v215, %v214
  %v295 = vpack.c.b16 %v217, %v216
  %v296 = vpack.c.b16 %v219, %v218
  %v297 = vpack.c.b16 %v221, %v220
  %v298 = vpack.c.b16 %v223, %v222
  %v299 = vpack.c.b16 %v225, %v224
  %v300 = vpack.c.b16 %v227, %v226
  %v301 = vpack.c.b16 %v229, %v228
  %v302 = vpack.c.b16 %v231, %v230
  %v303 = vpack.c.b16 %v233, %v232
  %v304 = vpack.c.b16 %v235, %v234
  %v305 = vpack.c.b16 %v237, %v236
  %v306 = vpack.c.b16 %v239, %v238
  %v307 = vpack.c.b16 %v241, %v240
  %v308 = vpack.c.b16 %v243, %v242
  %v309 = vpack.c.b16 %v245, %v244
  %v310 = vpack.c.b16 %v247, %v246
  %v311 = vpack.c.b16 %v249, %v248
  %v312 = vpack.c.b16 %v251, %v250
  %v313 = vpack.c.b16 %v253, %v252
  %v314 = vpack.c.b16 %v255, %v254
  %v315 = vpack.c.b16 %v257, %v256
  %v316 = vpack.c.b16 %v259, %v258
  %v317 = vpack.c.b16 %v261, %v260
  %v318 = vpack.c.b16 %v263, %v262
  %v319 = vpack.c.b16 %v265, %v264
  %v320 = vpack.c.b16 %v267, %v266
  %v321 = vpack.c.b16 %v269, %v268
  %v322 = vpack.c.b16 %v271, %v270
  %v323 = vpack.c.b16 %v273, %v272
  %v324 = vpack.c.b16 %v275, %v274
  %v325 = vpack.c.b16 %v277, %v276
  %v326 = vpack.c.b16 %v279, %v278
  %v327 = vpack.c.b16 %v281, %v280
  %v328 = vpack.c.b16 %v283, %v282
  %v329 = vpack.c.b16 %v285, %v284
  %v330 = vpack.c.b16 %v287, %v286
  %v331 = vpack.c.b16 %v289, %v288
  %v332 = vpack.c.b16 %v291, %v290
  %v333 = vpack.c.b16 %v293, %v292
  %374 = vmatprep.subr.bf16.mxu0 0
  %375 = vmatpush1.bf16.msra.mxu0 %v294
  %376 = vmatprep.subr.bf16.mxu0 0
  %377 = vmatpush1.bf16.msra.mxu0 %v295
  %378 = vmatprep.subr.bf16.mxu0 0
  %379 = vmatpush1.bf16.msra.mxu0 %v296
  %380 = vmatprep.subr.bf16.mxu0 0
  %381 = vmatpush1.bf16.msra.mxu0 %v297
  %382 = vmatprep.subr.bf16.mxu0 0
  %383 = vmatpush1.bf16.msra.mxu0 %v298
  %384 = vmatprep.subr.bf16.mxu0 0
  %385 = vmatpush1.bf16.msra.mxu0 %v299
  %386 = vmatprep.subr.bf16.mxu0 0
  %387 = vmatpush1.bf16.msra.mxu0 %v300
  %388 = vmatprep.subr.bf16.mxu0 0
  %389 = vmatpush1.bf16.msra.mxu0 %v301
  %390 = vmatprep.subr.bf16.mxu0 0
  %391 = vmatpush1.bf16.msra.mxu0 %v302
  %392 = vmatprep.subr.bf16.mxu0 0
  %393 = vmatpush1.bf16.msra.mxu0 %v303
  %394 = vmatprep.subr.bf16.mxu0 0
  %395 = vmatpush1.bf16.msra.mxu0 %v304
  %396 = vmatprep.subr.bf16.mxu0 0
  %397 = vmatpush1.bf16.msra.mxu0 %v305
  %398 = vmatprep.subr.bf16.mxu0 0
  %399 = vmatpush1.bf16.msra.mxu0 %v306
  %400 = vmatprep.subr.bf16.mxu0 0
  %401 = vmatpush1.bf16.msra.mxu0 %v307
  %402 = vmatprep.subr.bf16.mxu0 0
  %403 = vmatpush1.bf16.msra.mxu0 %v308
  %404 = vmatprep.subr.bf16.mxu0 0
  %405 = vmatpush1.bf16.msra.mxu0 %v309
  %406 = vmatprep.mubr.bf16.mxu0 %v125
  %407 = vmatmul.mubr.bf16.gmra.mrb[0].mxu0 %v124
  %v408 = vpop.f32.mrb[0].mxu0
  %v409 = vadd.f32 %v106, %v408
  %v410 = vpop.f32.mrb[0].mxu0
  %v411 = vpop.f32.mrb[0].mxu0
  %v412 = vadd.f32 %v106, %v411
  %v413 = vpop.f32.mrb[0].mxu0
  %414 = vdwg.mxu0
  %415 = vmatprep.subr.bf16.mxu0 0
  %416 = vmatpush1.bf16.msra.mxu0 %v310
  %417 = vmatprep.subr.bf16.mxu0 0
  %418 = vmatpush1.bf16.msra.mxu0 %v311
  %419 = vmatprep.subr.bf16.mxu0 0
  %420 = vmatpush1.bf16.msra.mxu0 %v312
  %421 = vmatprep.subr.bf16.mxu0 0
  %422 = vmatpush1.bf16.msra.mxu0 %v313
  %423 = vmatprep.subr.bf16.mxu0 0
  %424 = vmatpush1.bf16.msra.mxu0 %v314
  %425 = vmatprep.subr.bf16.mxu0 0
  %426 = vmatpush1.bf16.msra.mxu0 %v315
  %427 = vmatprep.subr.bf16.mxu0 0
  %428 = vmatpush1.bf16.msra.mxu0 %v316
  %429 = vmatprep.subr.bf16.mxu0 0
  %430 = vmatpush1.bf16.msra.mxu0 %v317
  %431 = vmatprep.subr.bf16.mxu0 0
  %432 = vmatpush1.bf16.msra.mxu0 %v318
  %433 = vmatprep.subr.bf16.mxu0 0
  %434 = vmatpush1.bf16.msra.mxu0 %v319
  %435 = vmatprep.subr.bf16.mxu0 0
  %436 = vmatpush1.bf16.msra.mxu0 %v320
  %437 = vmatprep.subr.bf16.mxu0 0
  %438 = vmatpush1.bf16.msra.mxu0 %v321
  %439 = vmatprep.subr.bf16.mxu0 0
  %440 = vmatpush1.bf16.msra.mxu0 %v322
  %441 = vmatprep.subr.bf16.mxu0 0
  %442 = vmatpush1.bf16.msra.mxu0 %v323
  %443 = vmatprep.subr.bf16.mxu0 0
  %444 = vmatpush1.bf16.msra.mxu0 %v324
  %445 = vmatprep.subr.bf16.mxu0 0
  %446 = vmatpush1.bf16.msra.mxu0 %v325
  %447 = vmatprep.mubr.bf16.mxu0 %v127
  %448 = vmatmul.mubr.bf16.gmra.mrb[0].mxu0 %v126
  %v449 = vpop.f32.mrb[0].mxu0
  %v450 = vadd.f32 %v409, %v449
  %v451 = vpop.f32.mrb[0].mxu0
  %v452 = vpop.f32.mrb[0].mxu0
  %v453 = vadd.f32 %v412, %v452
  %v454 = vpop.f32.mrb[0].mxu0
  %455 = vdwg.mxu0
  %456 = vmatprep.subr.bf16.mxu0 0
  %457 = vmatpush1.bf16.msra.mxu0 %v326
  %458 = vmatprep.subr.bf16.mxu0 0
  %459 = vmatpush1.bf16.msra.mxu0 %v327
  %460 = vmatprep.subr.bf16.mxu0 0
  %461 = vmatpush1.bf16.msra.mxu0 %v328
  %462 = vmatprep.subr.bf16.mxu0 0
  %463 = vmatpush1.bf16.msra.mxu0 %v329
  %464 = vmatprep.subr.bf16.mxu0 0
  %465 = vmatpush1.bf16.msra.mxu0 %v330
  %466 = vmatprep.subr.bf16.mxu0 0
  %467 = vmatpush1.bf16.msra.mxu0 %v331
  %468 = vmatprep.subr.bf16.mxu0 0
  %469 = vmatpush1.bf16.msra.mxu0 %v332
  %470 = vmatprep.subr.bf16.mxu0 0
  %471 = vmatpush1.bf16.msra.mxu0 %v333
  %472 = vmatprep.subr.bf16.mxu0 0
  %473 = vmatpush1.bf16.msra.mxu0 0
  %474 = vmatprep.subr.bf16.mxu0 0
  %475 = vmatpush1.bf16.msra.mxu0 0
  %476 = vmatprep.subr.bf16.mxu0 0
  %477 = vmatpush1.bf16.msra.mxu0 0
  %478 = vmatprep.subr.bf16.mxu0 0
  %479 = vmatpush1.bf16.msra.mxu0 0
  %480 = vmatprep.subr.bf16.mxu0 0
  %481 = vmatpush1.bf16.msra.mxu0 0
  %482 = vmatprep.subr.bf16.mxu0 0
  %483 = vmatpush1.bf16.msra.mxu0 0
  %484 = vmatprep.subr.bf16.mxu0 0
  %485 = vmatpush1.bf16.msra.mxu0 0
  %486 = vmatprep.subr.bf16.mxu0 0
  %487 = vmatpush1.bf16.msra.mxu0 0
  %488 = vmatprep.mubr.bf16.mxu0 0
  %489 = vmatmul.mubr.bf16.gmra.mrb[0].mxu0 %v128
  %v490 = vpop.f32.mrb[0].mxu0
  %v491 = vadd.f32 %v450, %v490
  %v492 = vpop.f32.mrb[0].mxu0
  %v493 = vpop.f32.mrb[0].mxu0
  %v494 = vadd.f32 %v453, %v493
  %v495 = vpop.f32.mrb[0].mxu0
  %496 = vdwg.mxu0
  %v497 = vmax.f32 %v491, 0.0
  %v498 = vmax.f32 %v494, 0.0
  %v499 = vpack.c.bf16 %v498, %v497
  %v501 = vunpack.c.l.b16 %v499
  %v502 = vunpack.c.h.b16 %v499
  %v503 = vpack.c.b16 %v501, %v501
  %v504 = vpack.c.b16 %v502, %v502
  %507 = vst [vmem:[%s3] sm:$0xf] %v503
  %508 = vst [vmem:[%s3 + $0x4] sm:$0xf] %v504
  // Predicated region
  $region14: #{dqn_forward.6} parent=0 // pred_check
    _
  $region15: #{dqn_forward.6} parent=0 // pred_check_branch
    %510 = sbr.rel (0) target = $region17
  $region16: #{dqn_forward.6} parent=0 // pred_region
    _
  $region17: #{dqn_forward.6} parent=0 // pred_fallthru
    _
  // Predicated region
  $region18: #{dqn_forward.6} parent=0 // pred_check
    _
  $region19: #{dqn_forward.6} parent=0 // pred_check_branch
    %512 = sbr.rel (0) target = $region21
  $region20: #{dqn_forward.6} parent=0 // pred_region
    _
  $region21: #{dqn_forward.6} parent=0 // pred_fallthru
    _

// kernel: dqn_forward.7
$region0: #{dqn_forward.7}
  #allocation0 [shape = 'u32[]', space=smem, size = 0x4, offset = 0x4, fixed_abs, tag = 'smem constant byte address 0x4 - core index']
  #allocation1 [shape = 'u32[144,128]{1,0:T(1,128)}', space=vmem, size = 0x12000, scoped, tag = 'internal scratch']
  %s0 = inlined_call_operand.vmem [shape: bf16[16,128], index: 0, kind: input, shape index: {}]
  %s1 = inlined_call_operand.vmem [shape: bf16[128,512], index: 1, kind: input, shape index: {}]
  %s2 = inlined_call_operand.vmem [shape: f32[1,512], index: 2, kind: input, shape index: {}]
  %s3 = inlined_call_operand.vmem [shape: bf16[512,128], index: 3, kind: input, shape index: {}]
  %s4 = inlined_call_operand.vmem [shape: f32[1,128], index: 4, kind: input, shape index: {}]
  %s5 = inlined_call_operand.vmem [shape: f32[16,128], index: 5, kind: output, shape index: {}]
  %s6 = sld [smem:[#allocation0]]
  $region30: #{dqn_forward.7} parent=0
    _
  %s8 = ssub.s32 1, %s6
  %s9 = scalar_select 0, %s8, %s6
  // Predicated region
  $region2: #{dqn_forward.7} parent=0 // pred_check
    _
  $region3: #{dqn_forward.7} parent=0 // pred_check_branch
    %11 = sbr.rel (0) target = $region5
  $region4: #{dqn_forward.7} parent=0 // pred_region
    _
  $region5: #{dqn_forward.7} parent=0 // pred_fallthru
    _
  // Predicated region
  $region6: #{dqn_forward.7} parent=0 // pred_check
    _
  $region7: #{dqn_forward.7} parent=0 // pred_check_branch
    %13 = sbr.rel (0) target = $region9
  $region8: #{dqn_forward.7} parent=0 // pred_region
    _
  $region9: #{dqn_forward.7} parent=0 // pred_fallthru
    _
  // Predicated region
  $region10: #{dqn_forward.7} parent=0 // pred_check
    _
  $region11: #{dqn_forward.7} parent=0 // pred_check_branch
    %15 = sbr.rel (0) target = $region13
  $region12: #{dqn_forward.7} parent=0 // pred_region
    _
  $region13: #{dqn_forward.7} parent=0 // pred_fallthru
    _
  // Predicated region
  $region14: #{dqn_forward.7} parent=0 // pred_check
    _
  $region15: #{dqn_forward.7} parent=0 // pred_check_branch
    %17 = sbr.rel (0) target = $region17
  $region16: #{dqn_forward.7} parent=0 // pred_region
    _
  $region17: #{dqn_forward.7} parent=0 // pred_fallthru
    _
  // Predicated region
  $region18: #{dqn_forward.7} parent=0 // pred_check
    _
  $region19: #{dqn_forward.7} parent=0 // pred_check_branch
    %19 = sbr.rel (0) target = $region21
  $region20: #{dqn_forward.7} parent=0 // pred_region
    _
  $region21: #{dqn_forward.7} parent=0 // pred_fallthru
    _
  %v21 = vld [vmem:[%s0] sm:$0xf]
  %v22 = vld [vmem:[%s0 + $0x4] sm:$0xf]
  %v23 = vld [vmem:[%s1] sm:$0xff]
  %v24 = vld [vmem:[%s1 + $0x8] sm:$0xff]
  %v25 = vld [vmem:[%s1 + $0x10] sm:$0xff]
  %v26 = vld [vmem:[%s1 + $0x18] sm:$0xff]
  %v27 = vld [vmem:[%s1 + $0x20] sm:$0xff]
  %v28 = vld [vmem:[%s1 + $0x28] sm:$0xff]
  %v29 = vld [vmem:[%s1 + $0x30] sm:$0xff]
  %v30 = vld [vmem:[%s1 + $0x38] sm:$0xff]
  %v31 = vld [vmem:[%s1 + $0x40] sm:$0xff]
  %v32 = vld [vmem:[%s1 + $0x48] sm:$0xff]
  %v33 = vld [vmem:[%s1 + $0x50] sm:$0xff]
  %v34 = vld [vmem:[%s1 + $0x58] sm:$0xff]
  %v35 = vld [vmem:[%s1 + $0x60] sm:$0xff]
  %v36 = vld [vmem:[%s1 + $0x68] sm:$0xff]
  %v37 = vld [vmem:[%s1 + $0x70] sm:$0xff]
  %v38 = vld [vmem:[%s1 + $0x78] sm:$0xff]
  %v39 = vld [vmem:[%s1 + $0x80] sm:$0xff]
  %v40 = vld [vmem:[%s1 + $0x88] sm:$0xff]
  %v41 = vld [vmem:[%s1 + $0x90] sm:$0xff]
  %v42 = vld [vmem:[%s1 + $0x98] sm:$0xff]
  %v43 = vld [vmem:[%s1 + $0xa0] sm:$0xff]
  %v44 = vld [vmem:[%s1 + $0xa8] sm:$0xff]
  %v45 = vld [vmem:[%s1 + $0xb0] sm:$0xff]
  %v46 = vld [vmem:[%s1 + $0xb8] sm:$0xff]
  %v47 = vld [vmem:[%s1 + $0xc0] sm:$0xff]
  %v48 = vld [vmem:[%s1 + $0xc8] sm:$0xff]
  %v49 = vld [vmem:[%s1 + $0xd0] sm:$0xff]
  %v50 = vld [vmem:[%s1 + $0xd8] sm:$0xff]
  %v51 = vld [vmem:[%s1 + $0xe0] sm:$0xff]
  %v52 = vld [vmem:[%s1 + $0xe8] sm:$0xff]
  %v53 = vld [vmem:[%s1 + $0xf0] sm:$0xff]
  %v54 = vld [vmem:[%s1 + $0xf8] sm:$0xff]
  %v55 = vld [vmem:[%s2] sm:$0xf]
  %v57 = vlaneseq
  %v58 = vshrl.u32 %v57, 7
  %v59 = vsub.s32 0, %v58
  %v60 = vrot.slane %v55, %v59
  %v61 = vlaneseq
  %v62 = vshrl.u32 %v61, 7
  %v63 = vsub.s32 1, %v62
  %v64 = vrot.slane %v55, %v63
  %v65 = vlaneseq
  %v66 = vshrl.u32 %v65, 7
  %v67 = vsub.s32 2, %v66
  %v68 = vrot.slane %v55, %v67
  %v69 = vlaneseq
  %v70 = vshrl.u32 %v69, 7
  %v71 = vsub.s32 3, %v70
  %v72 = vrot.slane %v55, %v71
  %v79 = vunpack.c.l.b16 %v21
  %v80 = vunpack.c.l.b16 %v22
  %v81 = vpack.c.b16 %v80, %v79
  %v115 = vunpack.c.l.b16 %v23
  %v116 = vunpack.c.h.b16 %v23
  %v117 = vunpack.c.l.b16 %v24
  %v118 = vunpack.c.h.b16 %v24
  %v119 = vunpack.c.l.b16 %v25
  %v120 = vunpack.c.h.b16 %v25
  %v121 = vunpack.c.l.b16 %v26
  %v122 = vunpack.c.h.b16 %v26
  %v123 = vunpack.c.l.b16 %v27
  %v124 = vunpack.c.h.b16 %v27
  %v125 = vunpack.c.l.b16 %v28
  %v126 = vunpack.c.h.b16 %v28
  %v127 = vunpack.c.l.b16 %v29
  %v128 = vunpack.c.h.b16 %v29
  %v129 = vunpack.c.l.b16 %v30
  %v130 = vunpack.c.h.b16 %v30
  %v131 = vunpack.c.l.b16 %v31
  %v132 = vunpack.c.h.b16 %v31
  %v133 = vunpack.c.l.b16 %v32
  %v134 = vunpack.c.h.b16 %v32
  %v135 = vunpack.c.l.b16 %v33
  %v136 = vunpack.c.h.b16 %v33
  %v137 = vunpack.c.l.b16 %v34
  %v138 = vunpack.c.h.b16 %v34
  %v139 = vunpack.c.l.b16 %v35
  %v140 = vunpack.c.h.b16 %v35
  %v141 = vunpack.c.l.b16 %v36
  %v142 = vunpack.c.h.b16 %v36
  %v143 = vunpack.c.l.b16 %v37
  %v144 = vunpack.c.h.b16 %v37
  %v145 = vunpack.c.l.b16 %v38
  %v146 = vunpack.c.h.b16 %v38
  %v147 = vunpack.c.l.b16 %v39
  %v148 = vunpack.c.h.b16 %v39
  %v149 = vunpack.c.l.b16 %v40
  %v150 = vunpack.c.h.b16 %v40
  %v151 = vunpack.c.l.b16 %v41
  %v152 = vunpack.c.h.b16 %v41
  %v153 = vunpack.c.l.b16 %v42
  %v154 = vunpack.c.h.b16 %v42
  %v155 = vunpack.c.l.b16 %v43
  %v156 = vunpack.c.h.b16 %v43
  %v157 = vunpack.c.l.b16 %v44
  %v158 = vunpack.c.h.b16 %v44
  %v159 = vunpack.c.l.b16 %v45
  %v160 = vunpack.c.h.b16 %v45
  %v161 = vunpack.c.l.b16 %v46
  %v162 = vunpack.c.h.b16 %v46
  %v163 = vunpack.c.l.b16 %v47
  %v164 = vunpack.c.h.b16 %v47
  %v165 = vunpack.c.l.b16 %v48
  %v166 = vunpack.c.h.b16 %v48
  %v167 = vunpack.c.l.b16 %v49
  %v168 = vunpack.c.h.b16 %v49
  %v169 = vunpack.c.l.b16 %v50
  %v170 = vunpack.c.h.b16 %v50
  %v171 = vunpack.c.l.b16 %v51
  %v172 = vunpack.c.h.b16 %v51
  %v173 = vunpack.c.l.b16 %v52
  %v174 = vunpack.c.h.b16 %v52
  %v175 = vunpack.c.l.b16 %v53
  %v176 = vunpack.c.h.b16 %v53
  %v177 = vunpack.c.l.b16 %v54
  %v178 = vunpack.c.h.b16 %v54
  %v179 = vpack.c.b16 %v119, %v115
  %v180 = vpack.c.b16 %v120, %v116
  %v181 = vpack.c.b16 %v121, %v117
  %v182 = vpack.c.b16 %v122, %v118
  %v183 = vpack.c.b16 %v127, %v123
  %v184 = vpack.c.b16 %v128, %v124
  %v185 = vpack.c.b16 %v129, %v125
  %v186 = vpack.c.b16 %v130, %v126
  %v187 = vpack.c.b16 %v135, %v131
  %v188 = vpack.c.b16 %v136, %v132
  %v189 = vpack.c.b16 %v137, %v133
  %v190 = vpack.c.b16 %v138, %v134
  %v191 = vpack.c.b16 %v143, %v139
  %v192 = vpack.c.b16 %v144, %v140
  %v193 = vpack.c.b16 %v145, %v141
  %v194 = vpack.c.b16 %v146, %v142
  %v195 = vpack.c.b16 %v151, %v147
  %v196 = vpack.c.b16 %v152, %v148
  %v197 = vpack.c.b16 %v153, %v149
  %v198 = vpack.c.b16 %v154, %v150
  %v199 = vpack.c.b16 %v159, %v155
  %v200 = vpack.c.b16 %v160, %v156
  %v201 = vpack.c.b16 %v161, %v157
  %v202 = vpack.c.b16 %v162, %v158
  %v203 = vpack.c.b16 %v167, %v163
  %v204 = vpack.c.b16 %v168, %v164
  %v205 = vpack.c.b16 %v169, %v165
  %v206 = vpack.c.b16 %v170, %v166
  %v207 = vpack.c.b16 %v175, %v171
  %v208 = vpack.c.b16 %v176, %v172
  %v209 = vpack.c.b16 %v177, %v173
  %v210 = vpack.c.b16 %v178, %v174
  %243 = vmatprep.subr.bf16.mxu0 %v180
  %244 = vmatpush1.bf16.msra.mxu0 %v179
  %245 = vmatprep.subr.bf16.mxu0 %v184
  %246 = vmatpush1.bf16.msra.mxu0 %v183
  %247 = vmatprep.subr.bf16.mxu0 %v188
  %248 = vmatpush1.bf16.msra.mxu0 %v187
  %249 = vmatprep.subr.bf16.mxu0 %v192
  %250 = vmatpush1.bf16.msra.mxu0 %v191
  %251 = vmatprep.subr.bf16.mxu0 %v196
  %252 = vmatpush1.bf16.msra.mxu0 %v195
  %253 = vmatprep.subr.bf16.mxu0 %v200
  %254 = vmatpush1.bf16.msra.mxu0 %v199
  %255 = vmatprep.subr.bf16.mxu0 %v204
  %256 = vmatpush1.bf16.msra.mxu0 %v203
  %257 = vmatprep.subr.bf16.mxu0 %v208
  %258 = vmatpush1.bf16.msra.mxu0 %v207
  %259 = vmatprep.subr.bf16.mxu0 0
  %260 = vmatpush1.bf16.msra.mxu0 0
  %261 = vmatprep.subr.bf16.mxu0 0
  %262 = vmatpush1.bf16.msra.mxu0 0
  %263 = vmatprep.subr.bf16.mxu0 0
  %264 = vmatpush1.bf16.msra.mxu0 0
  %265 = vmatprep.subr.bf16.mxu0 0
  %266 = vmatpush1.bf16.msra.mxu0 0
  %267 = vmatprep.subr.bf16.mxu0 0
  %268 = vmatpush1.bf16.msra.mxu0 0
  %269 = vmatprep.subr.bf16.mxu0 0
  %270 = vmatpush1.bf16.msra.mxu0 0
  %271 = vmatprep.subr.bf16.mxu0 0
  %272 = vmatpush1.bf16.msra.mxu0 0
  %273 = vmatprep.subr.bf16.mxu0 0
  %274 = vmatpush1.bf16.msra.mxu0 0
  %275 = vmatprep.mubr.bf16.mxu0 0
  %276 = vmatmul.mubr.bf16.gmra.mrb[0].mxu0 %v81
  %v277 = vpop.f32.mrb[0].mxu0
  %v278 = vadd.f32 %v60, %v277
  %v279 = vpop.f32.mrb[0].mxu0
  %v280 = vadd.f32 %v64, %v279
  %v281 = vpop.f32.mrb[0].mxu0
  %v282 = vadd.f32 %v60, %v281
  %v283 = vpop.f32.mrb[0].mxu0
  %v284 = vadd.f32 %v64, %v283
  %285 = vdwg.mxu0
  %286 = vmatprep.subr.bf16.mxu0 %v182
  %287 = vmatpush1.bf16.msra.mxu0 %v181
  %288 = vmatprep.subr.bf16.mxu0 %v186
  %289 = vmatpush1.bf16.msra.mxu0 %v185
  %290 = vmatprep.subr.bf16.mxu0 %v190
  %291 = vmatpush1.bf16.msra.mxu0 %v189
  %292 = vmatprep.subr.bf16.mxu0 %v194
  %293 = vmatpush1.bf16.msra.mxu0 %v193
  %294 = vmatprep.subr.bf16.mxu0 %v198
  %295 = vmatpush1.bf16.msra.mxu0 %v197
  %296 = vmatprep.subr.bf16.mxu0 %v202
  %297 = vmatpush1.bf16.msra.mxu0 %v201
  %298 = vmatprep.subr.bf16.mxu0 %v206
  %299 = vmatpush1.bf16.msra.mxu0 %v205
  %300 = vmatprep.subr.bf16.mxu0 %v210
  %301 = vmatpush1.bf16.msra.mxu0 %v209
  %302 = vmatprep.subr.bf16.mxu0 0
  %303 = vmatpush1.bf16.msra.mxu0 0
  %304 = vmatprep.subr.bf16.mxu0 0
  %305 = vmatpush1.bf16.msra.mxu0 0
  %306 = vmatprep.subr.bf16.mxu0 0
  %307 = vmatpush1.bf16.msra.mxu0 0
  %308 = vmatprep.subr.bf16.mxu0 0
  %309 = vmatpush1.bf16.msra.mxu0 0
  %310 = vmatprep.subr.bf16.mxu0 0
  %311 = vmatpush1.bf16.msra.mxu0 0
  %312 = vmatprep.subr.bf16.mxu0 0
  %313 = vmatpush1.bf16.msra.mxu0 0
  %314 = vmatprep.subr.bf16.mxu0 0
  %315 = vmatpush1.bf16.msra.mxu0 0
  %316 = vmatprep.subr.bf16.mxu0 0
  %317 = vmatpush1.bf16.msra.mxu0 0
  %318 = vmatprep.mubr.bf16.mxu0 0
  %319 = vmatmul.mubr.bf16.gmra.mrb[0].mxu0 %v81
  %v320 = vpop.f32.mrb[0].mxu0
  %v321 = vadd.f32 %v68, %v320
  %v322 = vpop.f32.mrb[0].mxu0
  %v323 = vadd.f32 %v72, %v322
  %v324 = vpop.f32.mrb[0].mxu0
  %v325 = vadd.f32 %v68, %v324
  %v326 = vpop.f32.mrb[0].mxu0
  %v327 = vadd.f32 %v72, %v326
  %328 = vdwg.mxu0
  %v329 = vmax.f32 %v278, 0.0
  %v330 = vmax.f32 %v280, 0.0
  %v331 = vmax.f32 %v321, 0.0
  %v332 = vmax.f32 %v323, 0.0
  %v333 = vmax.f32 %v282, 0.0
  %v334 = vmax.f32 %v284, 0.0
  %v335 = vmax.f32 %v325, 0.0
  %v336 = vmax.f32 %v327, 0.0
  %v337 = vpack.c.bf16 %v333, %v329
  %v338 = vpack.c.bf16 %v334, %v330
  %v339 = vpack.c.bf16 %v335, %v331
  %v340 = vpack.c.bf16 %v336, %v332
  %v341 = vld [vmem:[%s3] sm:$0xf]
  %v342 = vld [vmem:[%s3 + $0x4] sm:$0xf]
  %v343 = vld [vmem:[%s3 + $0x8] sm:$0xf]
  %v344 = vld [vmem:[%s3 + $0xc] sm:$0xf]
  %v345 = vld [vmem:[%s3 + $0x10] sm:$0xf]
  %v346 = vld [vmem:[%s3 + $0x14] sm:$0xf]
  %v347 = vld [vmem:[%s3 + $0x18] sm:$0xf]
  %v348 = vld [vmem:[%s3 + $0x1c] sm:$0xf]
  %v349 = vld [vmem:[%s3 + $0x20] sm:$0xf]
  %v350 = vld [vmem:[%s3 + $0x24] sm:$0xf]
  %v351 = vld [vmem:[%s3 + $0x28] sm:$0xf]
  %v352 = vld [vmem:[%s3 + $0x2c] sm:$0xf]
  %v353 = vld [vmem:[%s3 + $0x30] sm:$0xf]
  %v354 = vld [vmem:[%s3 + $0x34] sm:$0xf]
  %v355 = vld [vmem:[%s3 + $0x38] sm:$0xf]
  %v356 = vld [vmem:[%s3 + $0x3c] sm:$0xf]
  %v357 = vld [vmem:[%s3 + $0x40] sm:$0xf]
  %v358 = vld [vmem:[%s3 + $0x44] sm:$0xf]
  %v359 = vld [vmem:[%s3 + $0x48] sm:$0xf]
  %v360 = vld [vmem:[%s3 + $0x4c] sm:$0xf]
  %v361 = vld [vmem:[%s3 + $0x50] sm:$0xf]
  %v362 = vld [vmem:[%s3 + $0x54] sm:$0xf]
  %v363 = vld [vmem:[%s3 + $0x58] sm:$0xf]
  %v364 = vld [vmem:[%s3 + $0x5c] sm:$0xf]
  %v365 = vld [vmem:[%s3 + $0x60] sm:$0xf]
  %v366 = vld [vmem:[%s3 + $0x64] sm:$0xf]
  %v367 = vld [vmem:[%s3 + $0x68] sm:$0xf]
  %v368 = vld [vmem:[%s3 + $0x6c] sm:$0xf]
  %v369 = vld [vmem:[%s3 + $0x70] sm:$0xf]
  %v370 = vld [vmem:[%s3 + $0x74] sm:$0xf]
  %v371 = vld [vmem:[%s3 + $0x78] sm:$0xf]
  %v372 = vld [vmem:[%s3 + $0x7c] sm:$0xf]
  %v373 = vld [vmem:[%s3 + $0x80] sm:$0xf]
  %v374 = vld [vmem:[%s3 + $0x84] sm:$0xf]
  %v375 = vld [vmem:[%s3 + $0x88] sm:$0xf]
  %v376 = vld [vmem:[%s3 + $0x8c] sm:$0xf]
  %v377 = vld [vmem:[%s3 + $0x90] sm:$0xf]
  %v378 = vld [vmem:[%s3 + $0x94] sm:$0xf]
  %v379 = vld [vmem:[%s3 + $0x98] sm:$0xf]
  %v380 = vld [vmem:[%s3 + $0x9c] sm:$0xf]
  %v381 = vld [vmem:[%s3 + $0xa0] sm:$0xf]
  %v382 = vld [vmem:[%s3 + $0xa4] sm:$0xf]
  %v383 = vld [vmem:[%s3 + $0xa8] sm:$0xf]
  %v384 = vld [vmem:[%s3 + $0xac] sm:$0xf]
  %v385 = vld [vmem:[%s3 + $0xb0] sm:$0xf]
  %v386 = vld [vmem:[%s3 + $0xb4] sm:$0xf]
  %v387 = vld [vmem:[%s3 + $0xb8] sm:$0xf]
  %v388 = vld [vmem:[%s3 + $0xbc] sm:$0xf]
  %v389 = vld [vmem:[%s3 + $0xc0] sm:$0xf]
  %v390 = vld [vmem:[%s3 + $0xc4] sm:$0xf]
  %v391 = vld [vmem:[%s3 + $0xc8] sm:$0xf]
  %v392 = vld [vmem:[%s3 + $0xcc] sm:$0xf]
  %v393 = vld [vmem:[%s3 + $0xd0] sm:$0xf]
  %v394 = vld [vmem:[%s3 + $0xd4] sm:$0xf]
  %v395 = vld [vmem:[%s3 + $0xd8] sm:$0xf]
  %v396 = vld [vmem:[%s3 + $0xdc] sm:$0xf]
  %v397 = vld [vmem:[%s3 + $0xe0] sm:$0xf]
  %v398 = vld [vmem:[%s3 + $0xe4] sm:$0xf]
  %v399 = vld [vmem:[%s3 + $0xe8] sm:$0xf]
  %v400 = vld [vmem:[%s3 + $0xec] sm:$0xf]
  %v401 = vld [vmem:[%s3 + $0xf0] sm:$0xf]
  %v402 = vld [vmem:[%s3 + $0xf4] sm:$0xf]
  %v403 = vld [vmem:[%s3 + $0xf8] sm:$0xf]
  %v404 = vld [vmem:[%s3 + $0xfc] sm:$0xf]
  %v405 = vld [vmem:[%s4] sm:$0x1]
  %v407 = vlaneseq
  %v408 = vshrl.u32 %v407, 7
  %v409 = vsub.s32 0, %v408
  %v410 = vrot.slane %v405, %v409
  %v476 = vunpack.c.l.b16 %v341
  %v477 = vunpack.c.l.b16 %v342
  %v478 = vunpack.c.l.b16 %v343
  %v479 = vunpack.c.l.b16 %v344
  %v480 = vunpack.c.l.b16 %v345
  %v481 = vunpack.c.l.b16 %v346
  %v482 = vunpack.c.l.b16 %v347
  %v483 = vunpack.c.l.b16 %v348
  %v484 = vunpack.c.l.b16 %v349
  %v485 = vunpack.c.l.b16 %v350
  %v486 = vunpack.c.l.b16 %v351
  %v487 = vunpack.c.l.b16 %v352
  %v488 = vunpack.c.l.b16 %v353
  %v489 = vunpack.c.l.b16 %v354
  %v490 = vunpack.c.l.b16 %v355
  %v491 = vunpack.c.l.b16 %v356
  %v492 = vunpack.c.l.b16 %v357
  %v493 = vunpack.c.l.b16 %v358
  %v494 = vunpack.c.l.b16 %v359
  %v495 = vunpack.c.l.b16 %v360
  %v496 = vunpack.c.l.b16 %v361
  %v497 = vunpack.c.l.b16 %v362
  %v498 = vunpack.c.l.b16 %v363
  %v499 = vunpack.c.l.b16 %v364
  %v500 = vunpack.c.l.b16 %v365
  %v501 = vunpack.c.l.b16 %v366
  %v502 = vunpack.c.l.b16 %v367
  %v503 = vunpack.c.l.b16 %v368
  %v504 = vunpack.c.l.b16 %v369
  %v505 = vunpack.c.l.b16 %v370
  %v506 = vunpack.c.l.b16 %v371
  %v507 = vunpack.c.l.b16 %v372
  %v508 = vunpack.c.l.b16 %v373
  %v509 = vunpack.c.l.b16 %v374
  %v510 = vunpack.c.l.b16 %v375
  %v511 = vunpack.c.l.b16 %v376
  %v512 = vunpack.c.l.b16 %v377
  %v513 = vunpack.c.l.b16 %v378
  %v514 = vunpack.c.l.b16 %v379
  %v515 = vunpack.c.l.b16 %v380
  %v516 = vunpack.c.l.b16 %v381
  %v517 = vunpack.c.l.b16 %v382
  %v518 = vunpack.c.l.b16 %v383
  %v519 = vunpack.c.l.b16 %v384
  %v520 = vunpack.c.l.b16 %v385
  %v521 = vunpack.c.l.b16 %v386
  %v522 = vunpack.c.l.b16 %v387
  %v523 = vunpack.c.l.b16 %v388
  %v524 = vunpack.c.l.b16 %v389
  %v525 = vunpack.c.l.b16 %v390
  %v526 = vunpack.c.l.b16 %v391
  %v527 = vunpack.c.l.b16 %v392
  %v528 = vunpack.c.l.b16 %v393
  %v529 = vunpack.c.l.b16 %v394
  %v530 = vunpack.c.l.b16 %v395
  %v531 = vunpack.c.l.b16 %v396
  %v532 = vunpack.c.l.b16 %v397
  %v533 = vunpack.c.l.b16 %v398
  %v534 = vunpack.c.l.b16 %v399
  %v535 = vunpack.c.l.b16 %v400
  %v536 = vunpack.c.l.b16 %v401
  %v537 = vunpack.c.l.b16 %v402
  %v538 = vunpack.c.l.b16 %v403
  %v539 = vunpack.c.l.b16 %v404
  %v540 = vpack.c.b16 %v477, %v476
  %v541 = vpack.c.b16 %v479, %v478
  %v542 = vpack.c.b16 %v481, %v480
  %v543 = vpack.c.b16 %v483, %v482
  %v544 = vpack.c.b16 %v485, %v484
  %v545 = vpack.c.b16 %v487, %v486
  %v546 = vpack.c.b16 %v489, %v488
  %v547 = vpack.c.b16 %v491, %v490
  %v548 = vpack.c.b16 %v493, %v492
  %v549 = vpack.c.b16 %v495, %v494
  %v550 = vpack.c.b16 %v497, %v496
  %v551 = vpack.c.b16 %v499, %v498
  %v552 = vpack.c.b16 %v501, %v500
  %v553 = vpack.c.b16 %v503, %v502
  %v554 = vpack.c.b16 %v505, %v504
  %v555 = vpack.c.b16 %v507, %v506
  %v556 = vpack.c.b16 %v509, %v508
  %v557 = vpack.c.b16 %v511, %v510
  %v558 = vpack.c.b16 %v513, %v512
  %v559 = vpack.c.b16 %v515, %v514
  %v560 = vpack.c.b16 %v517, %v516
  %v561 = vpack.c.b16 %v519, %v518
  %v562 = vpack.c.b16 %v521, %v520
  %v563 = vpack.c.b16 %v523, %v522
  %v564 = vpack.c.b16 %v525, %v524
  %v565 = vpack.c.b16 %v527, %v526
  %v566 = vpack.c.b16 %v529, %v528
  %v567 = vpack.c.b16 %v531, %v530
  %v568 = vpack.c.b16 %v533, %v532
  %v569 = vpack.c.b16 %v535, %v534
  %v570 = vpack.c.b16 %v537, %v536
  %v571 = vpack.c.b16 %v539, %v538
  %604 = vmatprep.subr.bf16.mxu0 0
  %605 = vmatpush1.bf16.msra.mxu0 %v540
  %606 = vmatprep.subr.bf16.mxu0 0
  %607 = vmatpush1.bf16.msra.mxu0 %v541
  %608 = vmatprep.subr.bf16.mxu0 0
  %609 = vmatpush1.bf16.msra.mxu0 %v542
  %610 = vmatprep.subr.bf16.mxu0 0
  %611 = vmatpush1.bf16.msra.mxu0 %v543
  %612 = vmatprep.subr.bf16.mxu0 0
  %613 = vmatpush1.bf16.msra.mxu0 %v544
  %614 = vmatprep.subr.bf16.mxu0 0
  %615 = vmatpush1.bf16.msra.mxu0 %v545
  %616 = vmatprep.subr.bf16.mxu0 0
  %617 = vmatpush1.bf16.msra.mxu0 %v546
  %618 = vmatprep.subr.bf16.mxu0 0
  %619 = vmatpush1.bf16.msra.mxu0 %v547
  %620 = vmatprep.subr.bf16.mxu0 0
  %621 = vmatpush1.bf16.msra.mxu0 %v548
  %622 = vmatprep.subr.bf16.mxu0 0
  %623 = vmatpush1.bf16.msra.mxu0 %v549
  %624 = vmatprep.subr.bf16.mxu0 0
  %625 = vmatpush1.bf16.msra.mxu0 %v550
  %626 = vmatprep.subr.bf16.mxu0 0
  %627 = vmatpush1.bf16.msra.mxu0 %v551
  %628 = vmatprep.subr.bf16.mxu0 0
  %629 = vmatpush1.bf16.msra.mxu0 %v552
  %630 = vmatprep.subr.bf16.mxu0 0
  %631 = vmatpush1.bf16.msra.mxu0 %v553
  %632 = vmatprep.subr.bf16.mxu0 0
  %633 = vmatpush1.bf16.msra.mxu0 %v554
  %634 = vmatprep.subr.bf16.mxu0 0
  %635 = vmatpush1.bf16.msra.mxu0 %v555
  %636 = vmatprep.mubr.bf16.mxu0 %v338
  %637 = vmatmul.mubr.bf16.gmra.mrb[0].mxu0 %v337
  %v638 = vpop.f32.mrb[0].mxu0
  %v639 = vadd.f32 %v410, %v638
  %v640 = vpop.f32.mrb[0].mxu0
  %v641 = vpop.f32.mrb[0].mxu0
  %v642 = vadd.f32 %v410, %v641
  %v643 = vpop.f32.mrb[0].mxu0
  %644 = vdwg.mxu0
  %645 = vmatprep.subr.bf16.mxu0 0
  %646 = vmatpush1.bf16.msra.mxu0 %v556
  %647 = vmatprep.subr.bf16.mxu0 0
  %648 = vmatpush1.bf16.msra.mxu0 %v557
  %649 = vmatprep.subr.bf16.mxu0 0
  %650 = vmatpush1.bf16.msra.mxu0 %v558
  %651 = vmatprep.subr.bf16.mxu0 0
  %652 = vmatpush1.bf16.msra.mxu0 %v559
  %653 = vmatprep.subr.bf16.mxu0 0
  %654 = vmatpush1.bf16.msra.mxu0 %v560
  %655 = vmatprep.subr.bf16.mxu0 0
  %656 = vmatpush1.bf16.msra.mxu0 %v561
  %657 = vmatprep.subr.bf16.mxu0 0
  %658 = vmatpush1.bf16.msra.mxu0 %v562
  %659 = vmatprep.subr.bf16.mxu0 0
  %660 = vmatpush1.bf16.msra.mxu0 %v563
  %661 = vmatprep.subr.bf16.mxu0 0
  %662 = vmatpush1.bf16.msra.mxu0 %v564
  %663 = vmatprep.subr.bf16.mxu0 0
  %664 = vmatpush1.bf16.msra.mxu0 %v565
  %665 = vmatprep.subr.bf16.mxu0 0
  %666 = vmatpush1.bf16.msra.mxu0 %v566
  %667 = vmatprep.subr.bf16.mxu0 0
  %668 = vmatpush1.bf16.msra.mxu0 %v567
  %669 = vmatprep.subr.bf16.mxu0 0
  %670 = vmatpush1.bf16.msra.mxu0 %v568
  %671 = vmatprep.subr.bf16.mxu0 0
  %672 = vmatpush1.bf16.msra.mxu0 %v569
  %673 = vmatprep.subr.bf16.mxu0 0
  %674 = vmatpush1.bf16.msra.mxu0 %v570
  %675 = vmatprep.subr.bf16.mxu0 0
  %676 = vmatpush1.bf16.msra.mxu0 %v571
  %677 = vmatprep.mubr.bf16.mxu0 %v340
  %678 = vmatmul.mubr.bf16.gmra.mrb[0].mxu0 %v339
  %v679 = vpop.f32.mrb[0].mxu0
  %v680 = vadd.f32 %v639, %v679
  %v681 = vpop.f32.mrb[0].mxu0
  %v682 = vpop.f32.mrb[0].mxu0
  %v683 = vadd.f32 %v642, %v682
  %v684 = vpop.f32.mrb[0].mxu0
  %685 = vdwg.mxu0
  %686 = vst [vmem:[%s5] sm:$0xff] %v680
  %687 = vst [vmem:[%s5 + $0x8] sm:$0xff] %v683
  // Predicated region
  $region22: #{dqn_forward.7} parent=0 // pred_check
    _
  $region23: #{dqn_forward.7} parent=0 // pred_check_branch
    %689 = sbr.rel (0) target = $region25
  $region24: #{dqn_forward.7} parent=0 // pred_region
    _
  $region25: #{dqn_forward.7} parent=0 // pred_fallthru
    _
  // Predicated region
  $region26: #{dqn_forward.7} parent=0 // pred_check
    _
  $region27: #{dqn_forward.7} parent=0 // pred_check_branch
    %691 = sbr.rel (0) target = $region29
  $region28: #{dqn_forward.7} parent=0 // pred_region
    _
  $region29: #{dqn_forward.7} parent=0 // pred_fallthru
    _

</llo_original>
